<compile_context>
chip_gen: v6e
topology: v6e:2x2x1
jax: 0.10.0
libtpu: 0.0.40
codegen_flags: <defaults>
</compile_context>

<pallas_src>
import jax
import jax.numpy as jnp
import numpy as np
from jax.experimental import pallas as pl
from jax.experimental.pallas import tpu as pltpu

LANE = 128
HIDDEN_DIMS = [1024, 256, 64, 16, 1]   # from MLPClassifier.__init__


def _round_up(x, m):
    return ((x + m - 1) // m) * m


def _pad2d(a, shape):
    return jnp.pad(a, [(0, t - s) for s, t in zip(a.shape, shape)])


def mlp_kernel(x_ref,
               w1_ref, b1_ref,
               w2_ref, b2_ref,
               w3_ref, b3_ref,
               w4_ref, b4_ref,
               w5_ref, b5_ref,
               o_ref):
    # All matmuls: bf16 operands, f32 accumulation on the MXU.
    # Bias-add + ReLU epilogue in f32 (biases are f32), then re-cast to bf16
    # for the next MXU pass.
    h = jnp.dot(x_ref[...], w1_ref[...], preferred_element_type=jnp.float32)
    h = jnp.maximum(h + b1_ref[...], 0.0).astype(jnp.bfloat16)

    h = jnp.dot(h, w2_ref[...], preferred_element_type=jnp.float32)
    h = jnp.maximum(h + b2_ref[...], 0.0).astype(jnp.bfloat16)

    h = jnp.dot(h, w3_ref[...], preferred_element_type=jnp.float32)
    h = jnp.maximum(h + b3_ref[...], 0.0).astype(jnp.bfloat16)

    h = jnp.dot(h, w4_ref[...], preferred_element_type=jnp.float32)
    h = jnp.maximum(h + b4_ref[...], 0.0).astype(jnp.bfloat16)

    # Final layer: no activation (matches the PyTorch module). Padded output
    # columns (1..127) are exactly zero (zero weight cols, zero bias pad).
    h = jnp.dot(h, w5_ref[...], preferred_element_type=jnp.float32)
    o_ref[...] = (h + b5_ref[...]).astype(o_ref.dtype)


def mlp_forward(x, params, *, tile_b=256):
    """x: (B, D) float32. params: list of 5 (W, b); W is (in, out), b is (1, out)."""
    B, D = x.shape
    dims = [D] + HIDDEN_DIMS
    pdims = [_round_up(d, LANE) for d in dims]      # lane-dense feature dims

    # Pad (zero rows/cols) + cast weights to bf16; biases stay f32 (padded with 0).
    flat_params = []
    for (w, b), din, dout in zip(params, pdims[:-1], pdims[1:]):
        wp = _pad2d(w.astype(jnp.float32), (din, dout)).astype(jnp.bfloat16)
        bp = _pad2d(b.reshape(1, -1).astype(jnp.float32), (1, dout))
        flat_params += [wp, bp]

    # Batch tiling: big tiles for MXU utilization, zero-pad ragged batches.
    tile_b_eff = max(8, min(tile_b, _round_up(B, 8)))
    b_pad = _round_up(B, tile_b_eff)
    d_pad = pdims[0]
    out_pad = pdims[-1]
    xp = _pad2d(x, (b_pad, d_pad)).astype(jnp.bfloat16)

    grid = (b_pad // tile_b_eff,)

    def const_spec(a):
        # Full-array block, same block every grid step (stays resident in VMEM).
        return pl.BlockSpec(a.shape, lambda i: (0, 0))

    in_specs = [pl.BlockSpec((tile_b_eff, d_pad), lambda i: (i, 0))]  # x: batch-tiled
    in_specs += [const_spec(a) for a in flat_params]
    out_specs = pl.BlockSpec((tile_b_eff, out_pad), lambda i: (i, 0))

    out = pl.pallas_call(
        mlp_kernel,
        out_shape=jax.ShapeDtypeStruct((b_pad, out_pad), jnp.float32),
        grid_spec=pltpu.PrefetchScalarGridSpec(
            num_scalar_prefetch=0,
            grid=grid,
            in_specs=in_specs,
            out_specs=out_specs,
        ),
        compiler_params=pltpu.CompilerParams(
            dimension_semantics=("parallel",),
        ),
    )(xp, *flat_params)

    # Strip batch padding and the lane padding of the final (out=1) layer.
    return out[:B, :1]


def init_params(key, input_dim):
    """Deterministic init; layer sizes from MLPClassifier.__init__ (PyTorch-style)."""
    dims = [input_dim] + HIDDEN_DIMS
    params = []
    for i in range(len(dims) - 1):
        key, kw, kb = jax.random.split(key, 3)
        fan_in, fan_out = dims[i], dims[i + 1]
        bound = 1.0 / np.sqrt(fan_in)
        w = jax.random.uniform(kw, (fan_in, fan_out), jnp.float32, -bound, bound)
        b = jax.random.uniform(kb, (1, fan_out), jnp.float32, -bound, bound)
        params.append((w, b))
    return params


def mlp_reference(x, params):
    """f32 reference matching the PyTorch module's forward."""
    h = x
    for i, (w, b) in enumerate(params):
        h = h @ w + b
        if i < len(params) - 1:
            h = jnp.maximum(h, 0.0)
    return h


if __name__ == "__main__":
    key = jax.random.PRNGKey(0)
    k_x, k_p = jax.random.split(key)

    B, D = 8, 32  # small synthetic shapes: batch=8, input_dim=32
    x = jax.random.normal(k_x, (B, D), dtype=jnp.float32)
    params = init_params(k_p, D)

    out = mlp_forward(x, params, tile_b=256)
    out = jax.block_until_ready(out)

    ref = jax.block_until_ready(mlp_reference(x, params))
    # bf16 operands (f32 accumulation) -> compare with looser tolerance.
    if not np.allclose(np.asarray(out), np.asarray(ref), rtol=5e-2, atol=5e-2):
        raise AssertionError("Pallas MLP output mismatch vs reference")

    print("KERNEL_OK")
</pallas_src>

<mosaic_0001>
module attributes {stable_mosaic.version = 11 : i64} {
  func.func @mlp_kernel(%arg0: i32, %arg1: memref<8x128xbf16, #tpu.memory_space<vmem>>, %arg2: memref<128x1024xbf16, #tpu.memory_space<vmem>>, %arg3: memref<1x1024xf32, #tpu.memory_space<vmem>>, %arg4: memref<1024x256xbf16, #tpu.memory_space<vmem>>, %arg5: memref<1x256xf32, #tpu.memory_space<vmem>>, %arg6: memref<256x128xbf16, #tpu.memory_space<vmem>>, %arg7: memref<1x128xf32, #tpu.memory_space<vmem>>, %arg8: memref<128x128xbf16, #tpu.memory_space<vmem>>, %arg9: memref<1x128xf32, #tpu.memory_space<vmem>>, %arg10: memref<128x128xbf16, #tpu.memory_space<vmem>>, %arg11: memref<1x128xf32, #tpu.memory_space<vmem>>, %arg12: memref<8x128xf32, #tpu.memory_space<vmem>>) attributes {dimension_semantics = [#tpu.dimension_semantics<parallel>], iteration_bounds = array<i64: 1>, scalar_prefetch = 0 : i64, scratch_operands = 0 : i64, tpu.core_type = #tpu.core_type<tc>, window_params = [{transform_indices = @transform_0, window_bounds = array<i64: 8, 128>}, {pipeline_mode = #tpu.pipeline_mode<synchronous>, transform_indices = @transform_1, window_bounds = array<i64: 128, 1024>}, {pipeline_mode = #tpu.pipeline_mode<synchronous>, transform_indices = @transform_2, window_bounds = array<i64: 1, 1024>}, {pipeline_mode = #tpu.pipeline_mode<synchronous>, transform_indices = @transform_3, window_bounds = array<i64: 1024, 256>}, {pipeline_mode = #tpu.pipeline_mode<synchronous>, transform_indices = @transform_4, window_bounds = array<i64: 1, 256>}, {pipeline_mode = #tpu.pipeline_mode<synchronous>, transform_indices = @transform_5, window_bounds = array<i64: 256, 128>}, {pipeline_mode = #tpu.pipeline_mode<synchronous>, transform_indices = @transform_6, window_bounds = array<i64: 1, 128>}, {pipeline_mode = #tpu.pipeline_mode<synchronous>, transform_indices = @transform_7, window_bounds = array<i64: 128, 128>}, {pipeline_mode = #tpu.pipeline_mode<synchronous>, transform_indices = @transform_8, window_bounds = array<i64: 1, 128>}, {pipeline_mode = #tpu.pipeline_mode<synchronous>, transform_indices = @transform_9, window_bounds = array<i64: 128, 128>}, {pipeline_mode = #tpu.pipeline_mode<synchronous>, transform_indices = @transform_10, window_bounds = array<i64: 1, 128>}, {transform_indices = @transform_11, window_bounds = array<i64: 8, 128>}]} {
    %c0 = arith.constant 0 : index
    %c0_0 = arith.constant 0 : index
    %0 = vector.load %arg1[%c0, %c0_0] : memref<8x128xbf16, #tpu.memory_space<vmem>>, vector<8x128xbf16>
    %c0_1 = arith.constant 0 : index
    %c0_2 = arith.constant 0 : index
    %1 = vector.load %arg2[%c0_1, %c0_2] : memref<128x1024xbf16, #tpu.memory_space<vmem>>, vector<128x1024xbf16>
    %cst = arith.constant dense<0.000000e+00> : vector<8x1024xf32>
    %2 = tpu.matmul %0, %1, %cst {dimension_numbers = #tpu.dot_dimension_numbers<[1], [0], [0], [1], [0, 0, 1, 1], [], []>} : vector<8x128xbf16>, vector<128x1024xbf16>, vector<8x1024xf32> -> vector<8x1024xf32>
    %c0_3 = arith.constant 0 : index
    %c0_4 = arith.constant 0 : index
    %3 = vector.load %arg3[%c0_3, %c0_4] : memref<1x1024xf32, #tpu.memory_space<vmem>>, vector<1x1024xf32>
    %4 = vector.broadcast %3 : vector<1x1024xf32> to vector<8x1024xf32>
    %5 = arith.addf %2, %4 : vector<8x1024xf32>
    %cst_5 = arith.constant 0.000000e+00 : f32
    %6 = vector.broadcast %cst_5 : f32 to vector<8x1024xf32>
    %7 = arith.maximumf %5, %6 : vector<8x1024xf32>
    %8 = arith.truncf %7 : vector<8x1024xf32> to vector<8x1024xbf16>
    %c0_6 = arith.constant 0 : index
    %c0_7 = arith.constant 0 : index
    %9 = vector.load %arg4[%c0_6, %c0_7] : memref<1024x256xbf16, #tpu.memory_space<vmem>>, vector<1024x256xbf16>
    %cst_8 = arith.constant dense<0.000000e+00> : vector<8x256xf32>
    %10 = tpu.matmul %8, %9, %cst_8 {dimension_numbers = #tpu.dot_dimension_numbers<[1], [0], [0], [1], [0, 0, 1, 1], [], []>} : vector<8x1024xbf16>, vector<1024x256xbf16>, vector<8x256xf32> -> vector<8x256xf32>
    %c0_9 = arith.constant 0 : index
    %c0_10 = arith.constant 0 : index
    %11 = vector.load %arg5[%c0_9, %c0_10] : memref<1x256xf32, #tpu.memory_space<vmem>>, vector<1x256xf32>
    %12 = vector.broadcast %11 : vector<1x256xf32> to vector<8x256xf32>
    %13 = arith.addf %10, %12 : vector<8x256xf32>
    %cst_11 = arith.constant 0.000000e+00 : f32
    %14 = vector.broadcast %cst_11 : f32 to vector<8x256xf32>
    %15 = arith.maximumf %13, %14 : vector<8x256xf32>
    %16 = arith.truncf %15 : vector<8x256xf32> to vector<8x256xbf16>
    %c0_12 = arith.constant 0 : index
    %c0_13 = arith.constant 0 : index
    %17 = vector.load %arg6[%c0_12, %c0_13] : memref<256x128xbf16, #tpu.memory_space<vmem>>, vector<256x128xbf16>
    %cst_14 = arith.constant dense<0.000000e+00> : vector<8x128xf32>
    %18 = tpu.matmul %16, %17, %cst_14 {dimension_numbers = #tpu.dot_dimension_numbers<[1], [0], [0], [1], [0, 0, 1, 1], [], []>} : vector<8x256xbf16>, vector<256x128xbf16>, vector<8x128xf32> -> vector<8x128xf32>
    %c0_15 = arith.constant 0 : index
    %c0_16 = arith.constant 0 : index
    %19 = vector.load %arg7[%c0_15, %c0_16] : memref<1x128xf32, #tpu.memory_space<vmem>>, vector<1x128xf32>
    %20 = vector.broadcast %19 : vector<1x128xf32> to vector<8x128xf32>
    %21 = arith.addf %18, %20 : vector<8x128xf32>
    %cst_17 = arith.constant 0.000000e+00 : f32
    %22 = vector.broadcast %cst_17 : f32 to vector<8x128xf32>
    %23 = arith.maximumf %21, %22 : vector<8x128xf32>
    %24 = arith.truncf %23 : vector<8x128xf32> to vector<8x128xbf16>
    %c0_18 = arith.constant 0 : index
    %c0_19 = arith.constant 0 : index
    %25 = vector.load %arg8[%c0_18, %c0_19] : memref<128x128xbf16, #tpu.memory_space<vmem>>, vector<128x128xbf16>
    %cst_20 = arith.constant dense<0.000000e+00> : vector<8x128xf32>
    %26 = tpu.matmul %24, %25, %cst_20 {dimension_numbers = #tpu.dot_dimension_numbers<[1], [0], [0], [1], [0, 0, 1, 1], [], []>} : vector<8x128xbf16>, vector<128x128xbf16>, vector<8x128xf32> -> vector<8x128xf32>
    %c0_21 = arith.constant 0 : index
    %c0_22 = arith.constant 0 : index
    %27 = vector.load %arg9[%c0_21, %c0_22] : memref<1x128xf32, #tpu.memory_space<vmem>>, vector<1x128xf32>
    %28 = vector.broadcast %27 : vector<1x128xf32> to vector<8x128xf32>
    %29 = arith.addf %26, %28 : vector<8x128xf32>
    %cst_23 = arith.constant 0.000000e+00 : f32
    %30 = vector.broadcast %cst_23 : f32 to vector<8x128xf32>
    %31 = arith.maximumf %29, %30 : vector<8x128xf32>
    %32 = arith.truncf %31 : vector<8x128xf32> to vector<8x128xbf16>
    %c0_24 = arith.constant 0 : index
    %c0_25 = arith.constant 0 : index
    %33 = vector.load %arg10[%c0_24, %c0_25] : memref<128x128xbf16, #tpu.memory_space<vmem>>, vector<128x128xbf16>
    %cst_26 = arith.constant dense<0.000000e+00> : vector<8x128xf32>
    %34 = tpu.matmul %32, %33, %cst_26 {dimension_numbers = #tpu.dot_dimension_numbers<[1], [0], [0], [1], [0, 0, 1, 1], [], []>} : vector<8x128xbf16>, vector<128x128xbf16>, vector<8x128xf32> -> vector<8x128xf32>
    %c0_27 = arith.constant 0 : index
    %c0_28 = arith.constant 0 : index
    %35 = vector.load %arg11[%c0_27, %c0_28] : memref<1x128xf32, #tpu.memory_space<vmem>>, vector<1x128xf32>
    %36 = vector.broadcast %35 : vector<1x128xf32> to vector<8x128xf32>
    %37 = arith.addf %34, %36 : vector<8x128xf32>
    %c0_29 = arith.constant 0 : index
    %c0_30 = arith.constant 0 : index
    %38 = vector.load %arg12[%c0_29, %c0_30] : memref<8x128xf32, #tpu.memory_space<vmem>>, vector<8x128xf32>
    tpu.vector_store %arg12[%c0_29, %c0_30], %37 {strides = array<i32>} : memref<8x128xf32, #tpu.memory_space<vmem>>, vector<8x128xf32>,
    return
  }
  func.func @transform_0(%arg0: i32) -> (i32, i32) {
    %c0_i32 = arith.constant 0 : i32
    %c0_i32_0 = arith.constant 0 : i32
    return %arg0, %c0_i32 : i32, i32
  }
  func.func @transform_1(%arg0: i32) -> (i32, i32) {
    %c0_i32 = arith.constant 0 : i32
    %c0_i32_0 = arith.constant 0 : i32
    %c0_i32_1 = arith.constant 0 : i32
    return %c0_i32, %c0_i32_0 : i32, i32
  }
  func.func @transform_2(%arg0: i32) -> (i32, i32) {
    %c0_i32 = arith.constant 0 : i32
    %c0_i32_0 = arith.constant 0 : i32
    %c0_i32_1 = arith.constant 0 : i32
    return %c0_i32, %c0_i32_0 : i32, i32
  }
  func.func @transform_3(%arg0: i32) -> (i32, i32) {
    %c0_i32 = arith.constant 0 : i32
    %c0_i32_0 = arith.constant 0 : i32
    %c0_i32_1 = arith.constant 0 : i32
    return %c0_i32, %c0_i32_0 : i32, i32
  }
  func.func @transform_4(%arg0: i32) -> (i32, i32) {
    %c0_i32 = arith.constant 0 : i32
    %c0_i32_0 = arith.constant 0 : i32
    %c0_i32_1 = arith.constant 0 : i32
    return %c0_i32, %c0_i32_0 : i32, i32
  }
  func.func @transform_5(%arg0: i32) -> (i32, i32) {
    %c0_i32 = arith.constant 0 : i32
    %c0_i32_0 = arith.constant 0 : i32
    %c0_i32_1 = arith.constant 0 : i32
    return %c0_i32, %c0_i32_0 : i32, i32
  }
  func.func @transform_6(%arg0: i32) -> (i32, i32) {
    %c0_i32 = arith.constant 0 : i32
    %c0_i32_0 = arith.constant 0 : i32
    %c0_i32_1 = arith.constant 0 : i32
    return %c0_i32, %c0_i32_0 : i32, i32
  }
  func.func @transform_7(%arg0: i32) -> (i32, i32) {
    %c0_i32 = arith.constant 0 : i32
    %c0_i32_0 = arith.constant 0 : i32
    %c0_i32_1 = arith.constant 0 : i32
    return %c0_i32, %c0_i32_0 : i32, i32
  }
  func.func @transform_8(%arg0: i32) -> (i32, i32) {
    %c0_i32 = arith.constant 0 : i32
    %c0_i32_0 = arith.constant 0 : i32
    %c0_i32_1 = arith.constant 0 : i32
    return %c0_i32, %c0_i32_0 : i32, i32
  }
  func.func @transform_9(%arg0: i32) -> (i32, i32) {
    %c0_i32 = arith.constant 0 : i32
    %c0_i32_0 = arith.constant 0 : i32
    %c0_i32_1 = arith.constant 0 : i32
    return %c0_i32, %c0_i32_0 : i32, i32
  }
  func.func @transform_10(%arg0: i32) -> (i32, i32) {
    %c0_i32 = arith.constant 0 : i32
    %c0_i32_0 = arith.constant 0 : i32
    %c0_i32_1 = arith.constant 0 : i32
    return %c0_i32, %c0_i32_0 : i32, i32
  }
  func.func @transform_11(%arg0: i32) -> (i32, i32) {
    %c0_i32 = arith.constant 0 : i32
    %c0_i32_0 = arith.constant 0 : i32
    return %arg0, %c0_i32 : i32, i32
  }
}

</mosaic_0001>

<llo_original>
// kernel: tpu_custom_call.1
$region0: #{tpu_custom_call.1}
  #allocation0 [shape = 'u32[]', space=smem, size = 0x4, offset = 0x4, fixed_abs, tag = 'smem constant byte address 0x4 - core index']
  #allocation1 [shape = 'u32[144,128]{1,0:T(1,128)}', space=vmem, size = 0x12000, scoped, tag = 'internal scratch']
  %s0 = inlined_call_operand.hbm [shape: bf16[8,128], index: 0, kind: input, shape index: {}]
  %s1 = inlined_call_operand.hbm [shape: bf16[128,1024], index: 1, kind: input, shape index: {}]
  %s2 = inlined_call_operand.hbm [shape: f32[1,1024], index: 2, kind: input, shape index: {}]
  %s3 = inlined_call_operand.hbm [shape: bf16[1024,256], index: 3, kind: input, shape index: {}]
  %s4 = inlined_call_operand.vmem [shape: f32[1,256], index: 4, kind: input, shape index: {}]
  %s5 = inlined_call_operand.hbm [shape: bf16[256,128], index: 5, kind: input, shape index: {}]
  %s6 = inlined_call_operand.vmem [shape: f32[1,128], index: 6, kind: input, shape index: {}]
  %s7 = inlined_call_operand.hbm [shape: bf16[128,128], index: 7, kind: input, shape index: {}]
  %s8 = inlined_call_operand.vmem [shape: f32[1,128], index: 8, kind: input, shape index: {}]
  %s9 = inlined_call_operand.hbm [shape: bf16[128,128], index: 9, kind: input, shape index: {}]
  %s10 = inlined_call_operand.vmem [shape: f32[1,128], index: 10, kind: input, shape index: {}]
  %s11 = inlined_call_operand.hbm [shape: f32[8,128], index: 11, kind: output, shape index: {}]
  %s12 = sld [smem:[#allocation0]]
  $region82: #{tpu_custom_call.1} parent=0
    _
  %s14 = ssub.s32 1, %s12
  %s15 = scalar_select 0, %s14, %s12
  $region1: #{tpu_custom_call.1} parent=0
    #allocation2 [shape = 'u8[2048]{0}', space=vmem, size = 0x800, scoped, tag = 'input window, operand 0, single buffered']
    #allocation3 [shape = 's32[1]{0}', space=sflag, size = 0x4, scoped, tag = 'scoped memory for tpu_custom_call.1']
    #allocation4 [shape = 's32[1]{0}', space=sflag, size = 0x4, scoped, tag = 'scoped memory for tpu_custom_call.1']
    #allocation5 [shape = 'u8[262144]{0}', space=vmem, size = 0x40000, scoped, tag = 'input window, operand 1, single buffered']
    #allocation6 [shape = 's32[1]{0}', space=sflag, size = 0x4, scoped, tag = 'scoped memory for tpu_custom_call.1']
    #allocation7 [shape = 'u8[4096]{0}', space=vmem, size = 0x1000, scoped, tag = 'input window, operand 2, single buffered']
    #allocation8 [shape = 'u8[524288]{0}', space=vmem, size = 0x80000, scoped, tag = 'input window, operand 3, single buffered']
    #allocation9 [shape = 's32[1]{0}', space=sflag, size = 0x4, scoped, tag = 'scoped memory for tpu_custom_call.1']
    #allocation10 [shape = 'u8[65536]{0}', space=vmem, size = 0x10000, scoped, tag = 'input window, operand 5, single buffered']
    #allocation11 [shape = 'u8[32768]{0}', space=vmem, size = 0x8000, scoped, tag = 'input window, operand 7, single buffered']
    #allocation12 [shape = 's32[1]{0}', space=sflag, size = 0x4, scoped, tag = 'scoped memory for tpu_custom_call.1']
    #allocation13 [shape = 'u8[32768]{0}', space=vmem, size = 0x8000, scoped, tag = 'input window, operand 9, single buffered']
    #allocation14 [shape = 'u8[4096]{0}', space=vmem, size = 0x1000, scoped, tag = 'output window, operand 0, single buffered']
    %16 = vsyncpa [#allocation3], 0
    %17 = vsyncpa [#allocation6], 0
    %18 = vsyncpa [#allocation9], 0
    %19 = vsyncpa [#allocation12], 0
    %20 = vsyncpa [#allocation4], 0
    // Predicated region
    $region2: #{tpu_custom_call.1} parent=1 // pred_check
      _
    $region3: #{tpu_custom_call.1} parent=1 // pred_check_branch
      %22 = sbr.rel (0) target = $region5
    $region4: #{tpu_custom_call.1} parent=1 // pred_region
      %s24 = ssub.s32 64, 64
      %25 = vsyncadd [#allocation3], %s24
      %s27 = sshll.u32 [#allocation2], 4
      %s28 = int_to_ptr.vmem [resolvable:$true] %s27
      %30 = dma.hbm_to_vmem [thread:$0]  %s0, 64, %s28, [#allocation3]
    $region5: #{tpu_custom_call.1} parent=1 // pred_fallthru
      _
    // Predicated region
    $region6: #{tpu_custom_call.1} parent=1 // pred_check
      _
    $region7: #{tpu_custom_call.1} parent=1 // pred_check_branch
      %32 = sbr.rel (0) target = $region9
    $region8: #{tpu_custom_call.1} parent=1 // pred_region
      %s34 = ssub.s32 8192, 8192
      %35 = vsyncadd [#allocation6], %s34
      %s36 = sshll.u32 [#allocation5], 4
      %s37 = int_to_ptr.vmem [resolvable:$true] %s36
      %42 = dma.hbm_to_vmem [thread:$0]  %s1, 8192, %s37, [#allocation6], 512, 512, 32
    $region9: #{tpu_custom_call.1} parent=1 // pred_fallthru
      _
    // Predicated region
    $region10: #{tpu_custom_call.1} parent=1 // pred_check
      _
    $region11: #{tpu_custom_call.1} parent=1 // pred_check_branch
      %44 = sbr.rel (0) target = $region13
    $region12: #{tpu_custom_call.1} parent=1 // pred_region
      %s46 = ssub.s32 128, 128
      %47 = vsyncadd [#allocation6], %s46
      %s49 = sshll.u32 [#allocation7], 4
      %s50 = int_to_ptr.vmem [resolvable:$true] %s49
      %52 = dma.hbm_to_vmem [thread:$0]  %s2, 128, %s50, [#allocation6]
    $region13: #{tpu_custom_call.1} parent=1 // pred_fallthru
      _
    // Predicated region
    $region14: #{tpu_custom_call.1} parent=1 // pred_check
      _
    $region15: #{tpu_custom_call.1} parent=1 // pred_check_branch
      %54 = sbr.rel (0) target = $region17
    $region16: #{tpu_custom_call.1} parent=1 // pred_region
      %s56 = ssub.s32 16384, 16384
      %57 = vsyncadd [#allocation9], %s56
      %s58 = sshll.u32 [#allocation8], 4
      %s59 = int_to_ptr.vmem [resolvable:$true] %s58
      %64 = dma.hbm_to_vmem [thread:$0]  %s3, 16384, %s59, [#allocation9], 128, 128, 8
    $region17: #{tpu_custom_call.1} parent=1 // pred_fallthru
      _
    // Predicated region
    $region18: #{tpu_custom_call.1} parent=1 // pred_check
      _
    $region19: #{tpu_custom_call.1} parent=1 // pred_check_branch
      %66 = sbr.rel (0) target = $region21
    $region20: #{tpu_custom_call.1} parent=1 // pred_region
      _
    $region21: #{tpu_custom_call.1} parent=1 // pred_fallthru
      _
    // Predicated region
    $region22: #{tpu_custom_call.1} parent=1 // pred_check
      _
    $region23: #{tpu_custom_call.1} parent=1 // pred_check_branch
      %68 = sbr.rel (0) target = $region25
    $region24: #{tpu_custom_call.1} parent=1 // pred_region
      %s70 = ssub.s32 2048, 2048
      %71 = vsyncadd [#allocation9], %s70
      %s72 = sshll.u32 [#allocation10], 4
      %s73 = int_to_ptr.vmem [resolvable:$true] %s72
      %78 = dma.hbm_to_vmem [thread:$0]  %s5, 2048, %s73, [#allocation9], 64, 64, 4
    $region25: #{tpu_custom_call.1} parent=1 // pred_fallthru
      _
    // Predicated region
    $region26: #{tpu_custom_call.1} parent=1 // pred_check
      _
    $region27: #{tpu_custom_call.1} parent=1 // pred_check_branch
      %80 = sbr.rel (0) target = $region29
    $region28: #{tpu_custom_call.1} parent=1 // pred_region
      _
    $region29: #{tpu_custom_call.1} parent=1 // pred_fallthru
      _
    // Predicated region
    $region30: #{tpu_custom_call.1} parent=1 // pred_check
      _
    $region31: #{tpu_custom_call.1} parent=1 // pred_check_branch
      %82 = sbr.rel (0) target = $region33
    $region32: #{tpu_custom_call.1} parent=1 // pred_region
      %s84 = ssub.s32 1024, 1024
      %85 = vsyncadd [#allocation12], %s84
      %s86 = sshll.u32 [#allocation11], 4
      %s87 = int_to_ptr.vmem [resolvable:$true] %s86
      %92 = dma.hbm_to_vmem [thread:$0]  %s7, 1024, %s87, [#allocation12], 64, 64, 4
    $region33: #{tpu_custom_call.1} parent=1 // pred_fallthru
      _
    // Predicated region
    $region34: #{tpu_custom_call.1} parent=1 // pred_check
      _
    $region35: #{tpu_custom_call.1} parent=1 // pred_check_branch
      %94 = sbr.rel (0) target = $region37
    $region36: #{tpu_custom_call.1} parent=1 // pred_region
      _
    $region37: #{tpu_custom_call.1} parent=1 // pred_fallthru
      _
    // Predicated region
    $region38: #{tpu_custom_call.1} parent=1 // pred_check
      _
    $region39: #{tpu_custom_call.1} parent=1 // pred_check_branch
      %96 = sbr.rel (0) target = $region41
    $region40: #{tpu_custom_call.1} parent=1 // pred_region
      %s98 = ssub.s32 1024, 1024
      %99 = vsyncadd [#allocation12], %s98
      %s100 = sshll.u32 [#allocation13], 4
      %s101 = int_to_ptr.vmem [resolvable:$true] %s100
      %106 = dma.hbm_to_vmem [thread:$0]  %s9, 1024, %s101, [#allocation12], 64, 64, 4
    $region41: #{tpu_custom_call.1} parent=1 // pred_fallthru
      _
    // Predicated region
    $region42: #{tpu_custom_call.1} parent=1 // pred_check
      _
    $region43: #{tpu_custom_call.1} parent=1 // pred_check_branch
      %108 = sbr.rel (0) target = $region45
    $region44: #{tpu_custom_call.1} parent=1 // pred_region
      _
    $region45: #{tpu_custom_call.1} parent=1 // pred_fallthru
      _
    // Predicated region
    $region46: #{tpu_custom_call.1} parent=1 // pred_check
      _
    $region47: #{tpu_custom_call.1} parent=1 // pred_check_branch
      %110 = sbr.rel (0) target = $region49
    $region48: #{tpu_custom_call.1} parent=1 // pred_region
      %111 = dma.done [#allocation3], 64
    $region49: #{tpu_custom_call.1} parent=1 // pred_fallthru
      _
    // Predicated region
    $region50: #{tpu_custom_call.1} parent=1 // pred_check
      _
    $region51: #{tpu_custom_call.1} parent=1 // pred_check_branch
      %113 = sbr.rel (0) target = $region53
    $region52: #{tpu_custom_call.1} parent=1 // pred_region
      %114 = dma.done [#allocation6], 8192
    $region53: #{tpu_custom_call.1} parent=1 // pred_fallthru
      _
    // Predicated region
    $region54: #{tpu_custom_call.1} parent=1 // pred_check
      _
    $region55: #{tpu_custom_call.1} parent=1 // pred_check_branch
      %116 = sbr.rel (0) target = $region57
    $region56: #{tpu_custom_call.1} parent=1 // pred_region
      %117 = dma.done [#allocation6], 128
    $region57: #{tpu_custom_call.1} parent=1 // pred_fallthru
      _
    // Predicated region
    $region58: #{tpu_custom_call.1} parent=1 // pred_check
      _
    $region59: #{tpu_custom_call.1} parent=1 // pred_check_branch
      %119 = sbr.rel (0) target = $region61
    $region60: #{tpu_custom_call.1} parent=1 // pred_region
      %120 = dma.done [#allocation9], 16384
    $region61: #{tpu_custom_call.1} parent=1 // pred_fallthru
      _
    // Predicated region
    $region62: #{tpu_custom_call.1} parent=1 // pred_check
      _
    $region63: #{tpu_custom_call.1} parent=1 // pred_check_branch
      %122 = sbr.rel (0) target = $region65
    $region64: #{tpu_custom_call.1} parent=1 // pred_region
      %123 = dma.done [#allocation9], 2048
    $region65: #{tpu_custom_call.1} parent=1 // pred_fallthru
      _
    // Predicated region
    $region66: #{tpu_custom_call.1} parent=1 // pred_check
      _
    $region67: #{tpu_custom_call.1} parent=1 // pred_check_branch
      %125 = sbr.rel (0) target = $region69
    $region68: #{tpu_custom_call.1} parent=1 // pred_region
      %126 = dma.done [#allocation12], 1024
    $region69: #{tpu_custom_call.1} parent=1 // pred_fallthru
      _
    // Predicated region
    $region70: #{tpu_custom_call.1} parent=1 // pred_check
      _
    $region71: #{tpu_custom_call.1} parent=1 // pred_check_branch
      %128 = sbr.rel (0) target = $region73
    $region72: #{tpu_custom_call.1} parent=1 // pred_region
      %129 = dma.done [#allocation12], 1024
    $region73: #{tpu_custom_call.1} parent=1 // pred_fallthru
      _
    %v131 = vld [vmem:[#allocation2] sm:$0xf]
    %v132 = vld [vmem:[#allocation5] sm:$0xff]
    %v133 = vld [vmem:[#allocation5 + $0x8] sm:$0xff]
    %v134 = vld [vmem:[#allocation5 + $0x10] sm:$0xff]
    %v135 = vld [vmem:[#allocation5 + $0x18] sm:$0xff]
    %v136 = vld [vmem:[#allocation5 + $0x20] sm:$0xff]
    %v137 = vld [vmem:[#allocation5 + $0x28] sm:$0xff]
    %v138 = vld [vmem:[#allocation5 + $0x30] sm:$0xff]
    %v139 = vld [vmem:[#allocation5 + $0x38] sm:$0xff]
    %v140 = vld [vmem:[#allocation5 + $0x40] sm:$0xff]
    %v141 = vld [vmem:[#allocation5 + $0x48] sm:$0xff]
    %v142 = vld [vmem:[#allocation5 + $0x50] sm:$0xff]
    %v143 = vld [vmem:[#allocation5 + $0x58] sm:$0xff]
    %v144 = vld [vmem:[#allocation5 + $0x60] sm:$0xff]
    %v145 = vld [vmem:[#allocation5 + $0x68] sm:$0xff]
    %v146 = vld [vmem:[#allocation5 + $0x70] sm:$0xff]
    %v147 = vld [vmem:[#allocation5 + $0x78] sm:$0xff]
    %v148 = vld [vmem:[#allocation5 + $0x80] sm:$0xff]
    %v149 = vld [vmem:[#allocation5 + $0x88] sm:$0xff]
    %v150 = vld [vmem:[#allocation5 + $0x90] sm:$0xff]
    %v151 = vld [vmem:[#allocation5 + $0x98] sm:$0xff]
    %v152 = vld [vmem:[#allocation5 + $0xa0] sm:$0xff]
    %v153 = vld [vmem:[#allocation5 + $0xa8] sm:$0xff]
    %v154 = vld [vmem:[#allocation5 + $0xb0] sm:$0xff]
    %v155 = vld [vmem:[#allocation5 + $0xb8] sm:$0xff]
    %v156 = vld [vmem:[#allocation5 + $0xc0] sm:$0xff]
    %v157 = vld [vmem:[#allocation5 + $0xc8] sm:$0xff]
    %v158 = vld [vmem:[#allocation5 + $0xd0] sm:$0xff]
    %v159 = vld [vmem:[#allocation5 + $0xd8] sm:$0xff]
    %v160 = vld [vmem:[#allocation5 + $0xe0] sm:$0xff]
    %v161 = vld [vmem:[#allocation5 + $0xe8] sm:$0xff]
    %v162 = vld [vmem:[#allocation5 + $0xf0] sm:$0xff]
    %v163 = vld [vmem:[#allocation5 + $0xf8] sm:$0xff]
    %v164 = vld [vmem:[#allocation5 + $0x100] sm:$0xff]
    %v165 = vld [vmem:[#allocation5 + $0x108] sm:$0xff]
    %v166 = vld [vmem:[#allocation5 + $0x110] sm:$0xff]
    %v167 = vld [vmem:[#allocation5 + $0x118] sm:$0xff]
    %v168 = vld [vmem:[#allocation5 + $0x120] sm:$0xff]
    %v169 = vld [vmem:[#allocation5 + $0x128] sm:$0xff]
    %v170 = vld [vmem:[#allocation5 + $0x130] sm:$0xff]
    %v171 = vld [vmem:[#allocation5 + $0x138] sm:$0xff]
    %v172 = vld [vmem:[#allocation5 + $0x140] sm:$0xff]
    %v173 = vld [vmem:[#allocation5 + $0x148] sm:$0xff]
    %v174 = vld [vmem:[#allocation5 + $0x150] sm:$0xff]
    %v175 = vld [vmem:[#allocation5 + $0x158] sm:$0xff]
    %v176 = vld [vmem:[#allocation5 + $0x160] sm:$0xff]
    %v177 = vld [vmem:[#allocation5 + $0x168] sm:$0xff]
    %v178 = vld [vmem:[#allocation5 + $0x170] sm:$0xff]
    %v179 = vld [vmem:[#allocation5 + $0x178] sm:$0xff]
    %v180 = vld [vmem:[#allocation5 + $0x180] sm:$0xff]
    %v181 = vld [vmem:[#allocation5 + $0x188] sm:$0xff]
    %v182 = vld [vmem:[#allocation5 + $0x190] sm:$0xff]
    %v183 = vld [vmem:[#allocation5 + $0x198] sm:$0xff]
    %v184 = vld [vmem:[#allocation5 + $0x1a0] sm:$0xff]
    %v185 = vld [vmem:[#allocation5 + $0x1a8] sm:$0xff]
    %v186 = vld [vmem:[#allocation5 + $0x1b0] sm:$0xff]
    %v187 = vld [vmem:[#allocation5 + $0x1b8] sm:$0xff]
    %v188 = vld [vmem:[#allocation5 + $0x1c0] sm:$0xff]
    %v189 = vld [vmem:[#allocation5 + $0x1c8] sm:$0xff]
    %v190 = vld [vmem:[#allocation5 + $0x1d0] sm:$0xff]
    %v191 = vld [vmem:[#allocation5 + $0x1d8] sm:$0xff]
    %v192 = vld [vmem:[#allocation5 + $0x1e0] sm:$0xff]
    %v193 = vld [vmem:[#allocation5 + $0x1e8] sm:$0xff]
    %v194 = vld [vmem:[#allocation5 + $0x1f0] sm:$0xff]
    %v195 = vld [vmem:[#allocation5 + $0x1f8] sm:$0xff]
    %v196 = vld [vmem:[#allocation7] sm:$0xff]
    %v198 = vlaneseq
    %v199 = vshrl.u32 %v198, 7
    %v200 = vsub.s32 0, %v199
    %v201 = vrot.slane %v196, %v200
    %v202 = vlaneseq
    %v203 = vshrl.u32 %v202, 7
    %v204 = vsub.s32 1, %v203
    %v205 = vrot.slane %v196, %v204
    %v206 = vlaneseq
    %v207 = vshrl.u32 %v206, 7
    %v208 = vsub.s32 2, %v207
    %v209 = vrot.slane %v196, %v208
    %v210 = vlaneseq
    %v211 = vshrl.u32 %v210, 7
    %v212 = vsub.s32 3, %v211
    %v213 = vrot.slane %v196, %v212
    %v214 = vlaneseq
    %v215 = vshrl.u32 %v214, 7
    %v216 = vsub.s32 4, %v215
    %v217 = vrot.slane %v196, %v216
    %v218 = vlaneseq
    %v219 = vshrl.u32 %v218, 7
    %v220 = vsub.s32 5, %v219
    %v221 = vrot.slane %v196, %v220
    %v222 = vlaneseq
    %v223 = vshrl.u32 %v222, 7
    %v224 = vsub.s32 6, %v223
    %v225 = vrot.slane %v196, %v224
    %v226 = vlaneseq
    %v227 = vshrl.u32 %v226, 7
    %v228 = vsub.s32 7, %v227
    %v229 = vrot.slane %v196, %v228
    %v302 = vunpack.c.l.b16 %v132
    %v303 = vunpack.c.h.b16 %v132
    %v304 = vunpack.c.l.b16 %v133
    %v305 = vunpack.c.h.b16 %v133
    %v306 = vunpack.c.l.b16 %v134
    %v307 = vunpack.c.h.b16 %v134
    %v308 = vunpack.c.l.b16 %v135
    %v309 = vunpack.c.h.b16 %v135
    %v310 = vunpack.c.l.b16 %v136
    %v311 = vunpack.c.h.b16 %v136
    %v312 = vunpack.c.l.b16 %v137
    %v313 = vunpack.c.h.b16 %v137
    %v314 = vunpack.c.l.b16 %v138
    %v315 = vunpack.c.h.b16 %v138
    %v316 = vunpack.c.l.b16 %v139
    %v317 = vunpack.c.h.b16 %v139
    %v318 = vunpack.c.l.b16 %v140
    %v319 = vunpack.c.h.b16 %v140
    %v320 = vunpack.c.l.b16 %v141
    %v321 = vunpack.c.h.b16 %v141
    %v322 = vunpack.c.l.b16 %v142
    %v323 = vunpack.c.h.b16 %v142
    %v324 = vunpack.c.l.b16 %v143
    %v325 = vunpack.c.h.b16 %v143
    %v326 = vunpack.c.l.b16 %v144
    %v327 = vunpack.c.h.b16 %v144
    %v328 = vunpack.c.l.b16 %v145
    %v329 = vunpack.c.h.b16 %v145
    %v330 = vunpack.c.l.b16 %v146
    %v331 = vunpack.c.h.b16 %v146
    %v332 = vunpack.c.l.b16 %v147
    %v333 = vunpack.c.h.b16 %v147
    %v334 = vunpack.c.l.b16 %v148
    %v335 = vunpack.c.h.b16 %v148
    %v336 = vunpack.c.l.b16 %v149
    %v337 = vunpack.c.h.b16 %v149
    %v338 = vunpack.c.l.b16 %v150
    %v339 = vunpack.c.h.b16 %v150
    %v340 = vunpack.c.l.b16 %v151
    %v341 = vunpack.c.h.b16 %v151
    %v342 = vunpack.c.l.b16 %v152
    %v343 = vunpack.c.h.b16 %v152
    %v344 = vunpack.c.l.b16 %v153
    %v345 = vunpack.c.h.b16 %v153
    %v346 = vunpack.c.l.b16 %v154
    %v347 = vunpack.c.h.b16 %v154
    %v348 = vunpack.c.l.b16 %v155
    %v349 = vunpack.c.h.b16 %v155
    %v350 = vunpack.c.l.b16 %v156
    %v351 = vunpack.c.h.b16 %v156
    %v352 = vunpack.c.l.b16 %v157
    %v353 = vunpack.c.h.b16 %v157
    %v354 = vunpack.c.l.b16 %v158
    %v355 = vunpack.c.h.b16 %v158
    %v356 = vunpack.c.l.b16 %v159
    %v357 = vunpack.c.h.b16 %v159
    %v358 = vunpack.c.l.b16 %v160
    %v359 = vunpack.c.h.b16 %v160
    %v360 = vunpack.c.l.b16 %v161
    %v361 = vunpack.c.h.b16 %v161
    %v362 = vunpack.c.l.b16 %v162
    %v363 = vunpack.c.h.b16 %v162
    %v364 = vunpack.c.l.b16 %v163
    %v365 = vunpack.c.h.b16 %v163
    %v366 = vunpack.c.l.b16 %v164
    %v367 = vunpack.c.h.b16 %v164
    %v368 = vunpack.c.l.b16 %v165
    %v369 = vunpack.c.h.b16 %v165
    %v370 = vunpack.c.l.b16 %v166
    %v371 = vunpack.c.h.b16 %v166
    %v372 = vunpack.c.l.b16 %v167
    %v373 = vunpack.c.h.b16 %v167
    %v374 = vunpack.c.l.b16 %v168
    %v375 = vunpack.c.h.b16 %v168
    %v376 = vunpack.c.l.b16 %v169
    %v377 = vunpack.c.h.b16 %v169
    %v378 = vunpack.c.l.b16 %v170
    %v379 = vunpack.c.h.b16 %v170
    %v380 = vunpack.c.l.b16 %v171
    %v381 = vunpack.c.h.b16 %v171
    %v382 = vunpack.c.l.b16 %v172
    %v383 = vunpack.c.h.b16 %v172
    %v384 = vunpack.c.l.b16 %v173
    %v385 = vunpack.c.h.b16 %v173
    %v386 = vunpack.c.l.b16 %v174
    %v387 = vunpack.c.h.b16 %v174
    %v388 = vunpack.c.l.b16 %v175
    %v389 = vunpack.c.h.b16 %v175
    %v390 = vunpack.c.l.b16 %v176
    %v391 = vunpack.c.h.b16 %v176
    %v392 = vunpack.c.l.b16 %v177
    %v393 = vunpack.c.h.b16 %v177
    %v394 = vunpack.c.l.b16 %v178
    %v395 = vunpack.c.h.b16 %v178
    %v396 = vunpack.c.l.b16 %v179
    %v397 = vunpack.c.h.b16 %v179
    %v398 = vunpack.c.l.b16 %v180
    %v399 = vunpack.c.h.b16 %v180
    %v400 = vunpack.c.l.b16 %v181
    %v401 = vunpack.c.h.b16 %v181
    %v402 = vunpack.c.l.b16 %v182
    %v403 = vunpack.c.h.b16 %v182
    %v404 = vunpack.c.l.b16 %v183
    %v405 = vunpack.c.h.b16 %v183
    %v406 = vunpack.c.l.b16 %v184
    %v407 = vunpack.c.h.b16 %v184
    %v408 = vunpack.c.l.b16 %v185
    %v409 = vunpack.c.h.b16 %v185
    %v410 = vunpack.c.l.b16 %v186
    %v411 = vunpack.c.h.b16 %v186
    %v412 = vunpack.c.l.b16 %v187
    %v413 = vunpack.c.h.b16 %v187
    %v414 = vunpack.c.l.b16 %v188
    %v415 = vunpack.c.h.b16 %v188
    %v416 = vunpack.c.l.b16 %v189
    %v417 = vunpack.c.h.b16 %v189
    %v418 = vunpack.c.l.b16 %v190
    %v419 = vunpack.c.h.b16 %v190
    %v420 = vunpack.c.l.b16 %v191
    %v421 = vunpack.c.h.b16 %v191
    %v422 = vunpack.c.l.b16 %v192
    %v423 = vunpack.c.h.b16 %v192
    %v424 = vunpack.c.l.b16 %v193
    %v425 = vunpack.c.h.b16 %v193
    %v426 = vunpack.c.l.b16 %v194
    %v427 = vunpack.c.h.b16 %v194
    %v428 = vunpack.c.l.b16 %v195
    %v429 = vunpack.c.h.b16 %v195
    %v430 = vpack.c.b16 %v310, %v302
    %v431 = vpack.c.b16 %v311, %v303
    %v432 = vpack.c.b16 %v312, %v304
    %v433 = vpack.c.b16 %v313, %v305
    %v434 = vpack.c.b16 %v314, %v306
    %v435 = vpack.c.b16 %v315, %v307
    %v436 = vpack.c.b16 %v316, %v308
    %v437 = vpack.c.b16 %v317, %v309
    %v438 = vpack.c.b16 %v326, %v318
    %v439 = vpack.c.b16 %v327, %v319
    %v440 = vpack.c.b16 %v328, %v320
    %v441 = vpack.c.b16 %v329, %v321
    %v442 = vpack.c.b16 %v330, %v322
    %v443 = vpack.c.b16 %v331, %v323
    %v444 = vpack.c.b16 %v332, %v324
    %v445 = vpack.c.b16 %v333, %v325
    %v446 = vpack.c.b16 %v342, %v334
    %v447 = vpack.c.b16 %v343, %v335
    %v448 = vpack.c.b16 %v344, %v336
    %v449 = vpack.c.b16 %v345, %v337
    %v450 = vpack.c.b16 %v346, %v338
    %v451 = vpack.c.b16 %v347, %v339
    %v452 = vpack.c.b16 %v348, %v340
    %v453 = vpack.c.b16 %v349, %v341
    %v454 = vpack.c.b16 %v358, %v350
    %v455 = vpack.c.b16 %v359, %v351
    %v456 = vpack.c.b16 %v360, %v352
    %v457 = vpack.c.b16 %v361, %v353
    %v458 = vpack.c.b16 %v362, %v354
    %v459 = vpack.c.b16 %v363, %v355
    %v460 = vpack.c.b16 %v364, %v356
    %v461 = vpack.c.b16 %v365, %v357
    %v462 = vpack.c.b16 %v374, %v366
    %v463 = vpack.c.b16 %v375, %v367
    %v464 = vpack.c.b16 %v376, %v368
    %v465 = vpack.c.b16 %v377, %v369
    %v466 = vpack.c.b16 %v378, %v370
    %v467 = vpack.c.b16 %v379, %v371
    %v468 = vpack.c.b16 %v380, %v372
    %v469 = vpack.c.b16 %v381, %v373
    %v470 = vpack.c.b16 %v390, %v382
    %v471 = vpack.c.b16 %v391, %v383
    %v472 = vpack.c.b16 %v392, %v384
    %v473 = vpack.c.b16 %v393, %v385
    %v474 = vpack.c.b16 %v394, %v386
    %v475 = vpack.c.b16 %v395, %v387
    %v476 = vpack.c.b16 %v396, %v388
    %v477 = vpack.c.b16 %v397, %v389
    %v478 = vpack.c.b16 %v406, %v398
    %v479 = vpack.c.b16 %v407, %v399
    %v480 = vpack.c.b16 %v408, %v400
    %v481 = vpack.c.b16 %v409, %v401
    %v482 = vpack.c.b16 %v410, %v402
    %v483 = vpack.c.b16 %v411, %v403
    %v484 = vpack.c.b16 %v412, %v404
    %v485 = vpack.c.b16 %v413, %v405
    %v486 = vpack.c.b16 %v422, %v414
    %v487 = vpack.c.b16 %v423, %v415
    %v488 = vpack.c.b16 %v424, %v416
    %v489 = vpack.c.b16 %v425, %v417
    %v490 = vpack.c.b16 %v426, %v418
    %v491 = vpack.c.b16 %v427, %v419
    %v492 = vpack.c.b16 %v428, %v420
    %v493 = vpack.c.b16 %v429, %v421
    %558 = vmatprep.subr.bf16.mxu0 %v487
    %559 = vmatpush1.bf16.msra.mxu0 %v486
    %560 = vmatprep.subr.bf16.mxu0 %v479
    %561 = vmatpush1.bf16.msra.mxu0 %v478
    %562 = vmatprep.subr.bf16.mxu0 %v471
    %563 = vmatpush1.bf16.msra.mxu0 %v470
    %564 = vmatprep.subr.bf16.mxu0 %v463
    %565 = vmatpush1.bf16.msra.mxu0 %v462
    %566 = vmatprep.subr.bf16.mxu0 %v455
    %567 = vmatpush1.bf16.msra.mxu0 %v454
    %568 = vmatprep.subr.bf16.mxu0 %v447
    %569 = vmatpush1.bf16.msra.mxu0 %v446
    %570 = vmatprep.subr.bf16.mxu0 %v439
    %571 = vmatpush1.bf16.msra.mxu0 %v438
    %572 = vmatprep.subr.bf16.mxu0 %v431
    %573 = vmatpush1.bf16.msra.mxu0 %v430
    %574 = vmatprep.subr.bf16.mxu0 0
    %575 = vmatpush2.bf16.msra.mxu0 0
    %576 = vmatprep.subr.bf16.mxu0 0
    %577 = vmatpush2.bf16.msra.mxu0 0
    %578 = vmatprep.subr.bf16.mxu0 0
    %579 = vmatpush2.bf16.msra.mxu0 0
    %580 = vmatprep.subr.bf16.mxu0 0
    %581 = vmatpush2.bf16.msra.mxu0 0
    %582 = vmatprep.subr.bf16.mxu0 0
    %583 = vmatpush2.bf16.msra.mxu0 0
    %584 = vmatprep.subr.bf16.mxu0 0
    %585 = vmatpush2.bf16.msra.mxu0 0
    %586 = vmatprep.subr.bf16.mxu0 0
    %587 = vmatpush2.bf16.msra.mxu0 0
    %588 = vmatprep.subr.bf16.mxu0 0
    %589 = vmatpush2.bf16.msra.mxu0 0
    %590 = vmatprep.mubr.bf16.mxu0 0
    %591 = vmatmul.mubr.bf16.gmra.mxu0 %v131
    %v592 = vpop.f32.mrf.mxu0
    %v593 = vadd.f32 %v201, %v592
    %v594 = vpop.f32.mrf.mxu0
    %v595 = vadd.f32 %v205, %v594
    %v596 = vpop.f32.mrf.mxu0
    %v597 = vpop.f32.mrf.mxu0
    %598 = vdwg.mxu0
    %599 = vmatprep.subr.bf16.mxu0 %v489
    %600 = vmatpush1.bf16.msra.mxu0 %v488
    %601 = vmatprep.subr.bf16.mxu0 %v481
    %602 = vmatpush1.bf16.msra.mxu0 %v480
    %603 = vmatprep.subr.bf16.mxu0 %v473
    %604 = vmatpush1.bf16.msra.mxu0 %v472
    %605 = vmatprep.subr.bf16.mxu0 %v465
    %606 = vmatpush1.bf16.msra.mxu0 %v464
    %607 = vmatprep.subr.bf16.mxu0 %v457
    %608 = vmatpush1.bf16.msra.mxu0 %v456
    %609 = vmatprep.subr.bf16.mxu0 %v449
    %610 = vmatpush1.bf16.msra.mxu0 %v448
    %611 = vmatprep.subr.bf16.mxu0 %v441
    %612 = vmatpush1.bf16.msra.mxu0 %v440
    %613 = vmatprep.subr.bf16.mxu0 %v433
    %614 = vmatpush1.bf16.msra.mxu0 %v432
    %615 = vmatprep.subr.bf16.mxu0 0
    %616 = vmatpush2.bf16.msra.mxu0 0
    %617 = vmatprep.subr.bf16.mxu0 0
    %618 = vmatpush2.bf16.msra.mxu0 0
    %619 = vmatprep.subr.bf16.mxu0 0
    %620 = vmatpush2.bf16.msra.mxu0 0
    %621 = vmatprep.subr.bf16.mxu0 0
    %622 = vmatpush2.bf16.msra.mxu0 0
    %623 = vmatprep.subr.bf16.mxu0 0
    %624 = vmatpush2.bf16.msra.mxu0 0
    %625 = vmatprep.subr.bf16.mxu0 0
    %626 = vmatpush2.bf16.msra.mxu0 0
    %627 = vmatprep.subr.bf16.mxu0 0
    %628 = vmatpush2.bf16.msra.mxu0 0
    %629 = vmatprep.subr.bf16.mxu0 0
    %630 = vmatpush2.bf16.msra.mxu0 0
    %631 = vmatprep.mubr.bf16.mxu0 0
    %632 = vmatmul.mubr.bf16.gmra.mxu0 %v131
    %v633 = vpop.f32.mrf.mxu0
    %v634 = vadd.f32 %v209, %v633
    %v635 = vpop.f32.mrf.mxu0
    %v636 = vadd.f32 %v213, %v635
    %v637 = vpop.f32.mrf.mxu0
    %v638 = vpop.f32.mrf.mxu0
    %639 = vdwg.mxu0
    %640 = vmatprep.subr.bf16.mxu0 %v491
    %641 = vmatpush1.bf16.msra.mxu0 %v490
    %642 = vmatprep.subr.bf16.mxu0 %v483
    %643 = vmatpush1.bf16.msra.mxu0 %v482
    %644 = vmatprep.subr.bf16.mxu0 %v475
    %645 = vmatpush1.bf16.msra.mxu0 %v474
    %646 = vmatprep.subr.bf16.mxu0 %v467
    %647 = vmatpush1.bf16.msra.mxu0 %v466
    %648 = vmatprep.subr.bf16.mxu0 %v459
    %649 = vmatpush1.bf16.msra.mxu0 %v458
    %650 = vmatprep.subr.bf16.mxu0 %v451
    %651 = vmatpush1.bf16.msra.mxu0 %v450
    %652 = vmatprep.subr.bf16.mxu0 %v443
    %653 = vmatpush1.bf16.msra.mxu0 %v442
    %654 = vmatprep.subr.bf16.mxu0 %v435
    %655 = vmatpush1.bf16.msra.mxu0 %v434
    %656 = vmatprep.subr.bf16.mxu0 0
    %657 = vmatpush2.bf16.msra.mxu0 0
    %658 = vmatprep.subr.bf16.mxu0 0
    %659 = vmatpush2.bf16.msra.mxu0 0
    %660 = vmatprep.subr.bf16.mxu0 0
    %661 = vmatpush2.bf16.msra.mxu0 0
    %662 = vmatprep.subr.bf16.mxu0 0
    %663 = vmatpush2.bf16.msra.mxu0 0
    %664 = vmatprep.subr.bf16.mxu0 0
    %665 = vmatpush2.bf16.msra.mxu0 0
    %666 = vmatprep.subr.bf16.mxu0 0
    %667 = vmatpush2.bf16.msra.mxu0 0
    %668 = vmatprep.subr.bf16.mxu0 0
    %669 = vmatpush2.bf16.msra.mxu0 0
    %670 = vmatprep.subr.bf16.mxu0 0
    %671 = vmatpush2.bf16.msra.mxu0 0
    %672 = vmatprep.mubr.bf16.mxu0 0
    %673 = vmatmul.mubr.bf16.gmra.mxu0 %v131
    %v674 = vpop.f32.mrf.mxu0
    %v675 = vadd.f32 %v217, %v674
    %v676 = vpop.f32.mrf.mxu0
    %v677 = vadd.f32 %v221, %v676
    %v678 = vpop.f32.mrf.mxu0
    %v679 = vpop.f32.mrf.mxu0
    %680 = vdwg.mxu0
    %681 = vmatprep.subr.bf16.mxu0 %v493
    %682 = vmatpush1.bf16.msra.mxu0 %v492
    %683 = vmatprep.subr.bf16.mxu0 %v485
    %684 = vmatpush1.bf16.msra.mxu0 %v484
    %685 = vmatprep.subr.bf16.mxu0 %v477
    %686 = vmatpush1.bf16.msra.mxu0 %v476
    %687 = vmatprep.subr.bf16.mxu0 %v469
    %688 = vmatpush1.bf16.msra.mxu0 %v468
    %689 = vmatprep.subr.bf16.mxu0 %v461
    %690 = vmatpush1.bf16.msra.mxu0 %v460
    %691 = vmatprep.subr.bf16.mxu0 %v453
    %692 = vmatpush1.bf16.msra.mxu0 %v452
    %693 = vmatprep.subr.bf16.mxu0 %v445
    %694 = vmatpush1.bf16.msra.mxu0 %v444
    %695 = vmatprep.subr.bf16.mxu0 %v437
    %696 = vmatpush1.bf16.msra.mxu0 %v436
    %697 = vmatprep.subr.bf16.mxu0 0
    %698 = vmatpush2.bf16.msra.mxu0 0
    %699 = vmatprep.subr.bf16.mxu0 0
    %700 = vmatpush2.bf16.msra.mxu0 0
    %701 = vmatprep.subr.bf16.mxu0 0
    %702 = vmatpush2.bf16.msra.mxu0 0
    %703 = vmatprep.subr.bf16.mxu0 0
    %704 = vmatpush2.bf16.msra.mxu0 0
    %705 = vmatprep.subr.bf16.mxu0 0
    %706 = vmatpush2.bf16.msra.mxu0 0
    %707 = vmatprep.subr.bf16.mxu0 0
    %708 = vmatpush2.bf16.msra.mxu0 0
    %709 = vmatprep.subr.bf16.mxu0 0
    %710 = vmatpush2.bf16.msra.mxu0 0
    %711 = vmatprep.subr.bf16.mxu0 0
    %712 = vmatpush2.bf16.msra.mxu0 0
    %713 = vmatprep.mubr.bf16.mxu0 0
    %714 = vmatmul.mubr.bf16.gmra.mxu0 %v131
    %v715 = vpop.f32.mrf.mxu0
    %v716 = vadd.f32 %v225, %v715
    %v717 = vpop.f32.mrf.mxu0
    %v718 = vadd.f32 %v229, %v717
    %v719 = vpop.f32.mrf.mxu0
    %v720 = vpop.f32.mrf.mxu0
    %721 = vdwg.mxu0
    %v722 = vmax.f32 %v593, 0.0
    %v723 = vmax.f32 %v595, 0.0
    %v724 = vmax.f32 %v634, 0.0
    %v725 = vmax.f32 %v636, 0.0
    %v726 = vmax.f32 %v675, 0.0
    %v727 = vmax.f32 %v677, 0.0
    %v728 = vmax.f32 %v716, 0.0
    %v729 = vmax.f32 %v718, 0.0
    %v730 = vpack.c.bf16 %v722, %v722
    %v731 = vpack.c.bf16 %v723, %v723
    %v732 = vpack.c.bf16 %v724, %v724
    %v733 = vpack.c.bf16 %v725, %v725
    %v734 = vpack.c.bf16 %v726, %v726
    %v735 = vpack.c.bf16 %v727, %v727
    %v736 = vpack.c.bf16 %v728, %v728
    %v737 = vpack.c.bf16 %v729, %v729
    %v738 = vld [vmem:[#allocation8] sm:$0xff]
    %v739 = vld [vmem:[#allocation8 + $0x8] sm:$0xff]
    %v740 = vld [vmem:[#allocation8 + $0x10] sm:$0xff]
    %v741 = vld [vmem:[#allocation8 + $0x18] sm:$0xff]
    %v742 = vld [vmem:[#allocation8 + $0x20] sm:$0xff]
    %v743 = vld [vmem:[#allocation8 + $0x28] sm:$0xff]
    %v744 = vld [vmem:[#allocation8 + $0x30] sm:$0xff]
    %v745 = vld [vmem:[#allocation8 + $0x38] sm:$0xff]
    %v746 = vld [vmem:[#allocation8 + $0x40] sm:$0xff]
    %v747 = vld [vmem:[#allocation8 + $0x48] sm:$0xff]
    %v748 = vld [vmem:[#allocation8 + $0x50] sm:$0xff]
    %v749 = vld [vmem:[#allocation8 + $0x58] sm:$0xff]
    %v750 = vld [vmem:[#allocation8 + $0x60] sm:$0xff]
    %v751 = vld [vmem:[#allocation8 + $0x68] sm:$0xff]
    %v752 = vld [vmem:[#allocation8 + $0x70] sm:$0xff]
    %v753 = vld [vmem:[#allocation8 + $0x78] sm:$0xff]
    %v754 = vld [vmem:[#allocation8 + $0x80] sm:$0xff]
    %v755 = vld [vmem:[#allocation8 + $0x88] sm:$0xff]
    %v756 = vld [vmem:[#allocation8 + $0x90] sm:$0xff]
    %v757 = vld [vmem:[#allocation8 + $0x98] sm:$0xff]
    %v758 = vld [vmem:[#allocation8 + $0xa0] sm:$0xff]
    %v759 = vld [vmem:[#allocation8 + $0xa8] sm:$0xff]
    %v760 = vld [vmem:[#allocation8 + $0xb0] sm:$0xff]
    %v761 = vld [vmem:[#allocation8 + $0xb8] sm:$0xff]
    %v762 = vld [vmem:[#allocation8 + $0xc0] sm:$0xff]
    %v763 = vld [vmem:[#allocation8 + $0xc8] sm:$0xff]
    %v764 = vld [vmem:[#allocation8 + $0xd0] sm:$0xff]
    %v765 = vld [vmem:[#allocation8 + $0xd8] sm:$0xff]
    %v766 = vld [vmem:[#allocation8 + $0xe0] sm:$0xff]
    %v767 = vld [vmem:[#allocation8 + $0xe8] sm:$0xff]
    %v768 = vld [vmem:[#allocation8 + $0xf0] sm:$0xff]
    %v769 = vld [vmem:[#allocation8 + $0xf8] sm:$0xff]
    %v770 = vld [vmem:[#allocation8 + $0x100] sm:$0xff]
    %v771 = vld [vmem:[#allocation8 + $0x108] sm:$0xff]
    %v772 = vld [vmem:[#allocation8 + $0x110] sm:$0xff]
    %v773 = vld [vmem:[#allocation8 + $0x118] sm:$0xff]
    %v774 = vld [vmem:[#allocation8 + $0x120] sm:$0xff]
    %v775 = vld [vmem:[#allocation8 + $0x128] sm:$0xff]
    %v776 = vld [vmem:[#allocation8 + $0x130] sm:$0xff]
    %v777 = vld [vmem:[#allocation8 + $0x138] sm:$0xff]
    %v778 = vld [vmem:[#allocation8 + $0x140] sm:$0xff]
    %v779 = vld [vmem:[#allocation8 + $0x148] sm:$0xff]
    %v780 = vld [vmem:[#allocation8 + $0x150] sm:$0xff]
    %v781 = vld [vmem:[#allocation8 + $0x158] sm:$0xff]
    %v782 = vld [vmem:[#allocation8 + $0x160] sm:$0xff]
    %v783 = vld [vmem:[#allocation8 + $0x168] sm:$0xff]
    %v784 = vld [vmem:[#allocation8 + $0x170] sm:$0xff]
    %v785 = vld [vmem:[#allocation8 + $0x178] sm:$0xff]
    %v786 = vld [vmem:[#allocation8 + $0x180] sm:$0xff]
    %v787 = vld [vmem:[#allocation8 + $0x188] sm:$0xff]
    %v788 = vld [vmem:[#allocation8 + $0x190] sm:$0xff]
    %v789 = vld [vmem:[#allocation8 + $0x198] sm:$0xff]
    %v790 = vld [vmem:[#allocation8 + $0x1a0] sm:$0xff]
    %v791 = vld [vmem:[#allocation8 + $0x1a8] sm:$0xff]
    %v792 = vld [vmem:[#allocation8 + $0x1b0] sm:$0xff]
    %v793 = vld [vmem:[#allocation8 + $0x1b8] sm:$0xff]
    %v794 = vld [vmem:[#allocation8 + $0x1c0] sm:$0xff]
    %v795 = vld [vmem:[#allocation8 + $0x1c8] sm:$0xff]
    %v796 = vld [vmem:[#allocation8 + $0x1d0] sm:$0xff]
    %v797 = vld [vmem:[#allocation8 + $0x1d8] sm:$0xff]
    %v798 = vld [vmem:[#allocation8 + $0x1e0] sm:$0xff]
    %v799 = vld [vmem:[#allocation8 + $0x1e8] sm:$0xff]
    %v800 = vld [vmem:[#allocation8 + $0x1f0] sm:$0xff]
    %v801 = vld [vmem:[#allocation8 + $0x1f8] sm:$0xff]
    %v802 = vld [vmem:[#allocation8 + $0x200] sm:$0xff]
    %v803 = vld [vmem:[#allocation8 + $0x208] sm:$0xff]
    %v804 = vld [vmem:[#allocation8 + $0x210] sm:$0xff]
    %v805 = vld [vmem:[#allocation8 + $0x218] sm:$0xff]
    %v806 = vld [vmem:[#allocation8 + $0x220] sm:$0xff]
    %v807 = vld [vmem:[#allocation8 + $0x228] sm:$0xff]
    %v808 = vld [vmem:[#allocation8 + $0x230] sm:$0xff]
    %v809 = vld [vmem:[#allocation8 + $0x238] sm:$0xff]
    %v810 = vld [vmem:[#allocation8 + $0x240] sm:$0xff]
    %v811 = vld [vmem:[#allocation8 + $0x248] sm:$0xff]
    %v812 = vld [vmem:[#allocation8 + $0x250] sm:$0xff]
    %v813 = vld [vmem:[#allocation8 + $0x258] sm:$0xff]
    %v814 = vld [vmem:[#allocation8 + $0x260] sm:$0xff]
    %v815 = vld [vmem:[#allocation8 + $0x268] sm:$0xff]
    %v816 = vld [vmem:[#allocation8 + $0x270] sm:$0xff]
    %v817 = vld [vmem:[#allocation8 + $0x278] sm:$0xff]
    %v818 = vld [vmem:[#allocation8 + $0x280] sm:$0xff]
    %v819 = vld [vmem:[#allocation8 + $0x288] sm:$0xff]
    %v820 = vld [vmem:[#allocation8 + $0x290] sm:$0xff]
    %v821 = vld [vmem:[#allocation8 + $0x298] sm:$0xff]
    %v822 = vld [vmem:[#allocation8 + $0x2a0] sm:$0xff]
    %v823 = vld [vmem:[#allocation8 + $0x2a8] sm:$0xff]
    %v824 = vld [vmem:[#allocation8 + $0x2b0] sm:$0xff]
    %v825 = vld [vmem:[#allocation8 + $0x2b8] sm:$0xff]
    %v826 = vld [vmem:[#allocation8 + $0x2c0] sm:$0xff]
    %v827 = vld [vmem:[#allocation8 + $0x2c8] sm:$0xff]
    %v828 = vld [vmem:[#allocation8 + $0x2d0] sm:$0xff]
    %v829 = vld [vmem:[#allocation8 + $0x2d8] sm:$0xff]
    %v830 = vld [vmem:[#allocation8 + $0x2e0] sm:$0xff]
    %v831 = vld [vmem:[#allocation8 + $0x2e8] sm:$0xff]
    %v832 = vld [vmem:[#allocation8 + $0x2f0] sm:$0xff]
    %v833 = vld [vmem:[#allocation8 + $0x2f8] sm:$0xff]
    %v834 = vld [vmem:[#allocation8 + $0x300] sm:$0xff]
    %v835 = vld [vmem:[#allocation8 + $0x308] sm:$0xff]
    %v836 = vld [vmem:[#allocation8 + $0x310] sm:$0xff]
    %v837 = vld [vmem:[#allocation8 + $0x318] sm:$0xff]
    %v838 = vld [vmem:[#allocation8 + $0x320] sm:$0xff]
    %v839 = vld [vmem:[#allocation8 + $0x328] sm:$0xff]
    %v840 = vld [vmem:[#allocation8 + $0x330] sm:$0xff]
    %v841 = vld [vmem:[#allocation8 + $0x338] sm:$0xff]
    %v842 = vld [vmem:[#allocation8 + $0x340] sm:$0xff]
    %v843 = vld [vmem:[#allocation8 + $0x348] sm:$0xff]
    %v844 = vld [vmem:[#allocation8 + $0x350] sm:$0xff]
    %v845 = vld [vmem:[#allocation8 + $0x358] sm:$0xff]
    %v846 = vld [vmem:[#allocation8 + $0x360] sm:$0xff]
    %v847 = vld [vmem:[#allocation8 + $0x368] sm:$0xff]
    %v848 = vld [vmem:[#allocation8 + $0x370] sm:$0xff]
    %v849 = vld [vmem:[#allocation8 + $0x378] sm:$0xff]
    %v850 = vld [vmem:[#allocation8 + $0x380] sm:$0xff]
    %v851 = vld [vmem:[#allocation8 + $0x388] sm:$0xff]
    %v852 = vld [vmem:[#allocation8 + $0x390] sm:$0xff]
    %v853 = vld [vmem:[#allocation8 + $0x398] sm:$0xff]
    %v854 = vld [vmem:[#allocation8 + $0x3a0] sm:$0xff]
    %v855 = vld [vmem:[#allocation8 + $0x3a8] sm:$0xff]
    %v856 = vld [vmem:[#allocation8 + $0x3b0] sm:$0xff]
    %v857 = vld [vmem:[#allocation8 + $0x3b8] sm:$0xff]
    %v858 = vld [vmem:[#allocation8 + $0x3c0] sm:$0xff]
    %v859 = vld [vmem:[#allocation8 + $0x3c8] sm:$0xff]
    %v860 = vld [vmem:[#allocation8 + $0x3d0] sm:$0xff]
    %v861 = vld [vmem:[#allocation8 + $0x3d8] sm:$0xff]
    %v862 = vld [vmem:[#allocation8 + $0x3e0] sm:$0xff]
    %v863 = vld [vmem:[#allocation8 + $0x3e8] sm:$0xff]
    %v864 = vld [vmem:[#allocation8 + $0x3f0] sm:$0xff]
    %v865 = vld [vmem:[#allocation8 + $0x3f8] sm:$0xff]
    %v866 = vld [vmem:[%s4] sm:$0x3]
    %v868 = vlaneseq
    %v869 = vshrl.u32 %v868, 7
    %v870 = vsub.s32 0, %v869
    %v871 = vrot.slane %v866, %v870
    %v872 = vlaneseq
    %v873 = vshrl.u32 %v872, 7
    %v874 = vsub.s32 1, %v873
    %v875 = vrot.slane %v866, %v874
    %v1006 = vunpack.c.l.b16 %v738
    %v1007 = vunpack.c.h.b16 %v738
    %v1008 = vunpack.c.l.b16 %v739
    %v1009 = vunpack.c.h.b16 %v739
    %v1010 = vunpack.c.l.b16 %v740
    %v1011 = vunpack.c.h.b16 %v740
    %v1012 = vunpack.c.l.b16 %v741
    %v1013 = vunpack.c.h.b16 %v741
    %v1014 = vunpack.c.l.b16 %v742
    %v1015 = vunpack.c.h.b16 %v742
    %v1016 = vunpack.c.l.b16 %v743
    %v1017 = vunpack.c.h.b16 %v743
    %v1018 = vunpack.c.l.b16 %v744
    %v1019 = vunpack.c.h.b16 %v744
    %v1020 = vunpack.c.l.b16 %v745
    %v1021 = vunpack.c.h.b16 %v745
    %v1022 = vunpack.c.l.b16 %v746
    %v1023 = vunpack.c.h.b16 %v746
    %v1024 = vunpack.c.l.b16 %v747
    %v1025 = vunpack.c.h.b16 %v747
    %v1026 = vunpack.c.l.b16 %v748
    %v1027 = vunpack.c.h.b16 %v748
    %v1028 = vunpack.c.l.b16 %v749
    %v1029 = vunpack.c.h.b16 %v749
    %v1030 = vunpack.c.l.b16 %v750
    %v1031 = vunpack.c.h.b16 %v750
    %v1032 = vunpack.c.l.b16 %v751
    %v1033 = vunpack.c.h.b16 %v751
    %v1034 = vunpack.c.l.b16 %v752
    %v1035 = vunpack.c.h.b16 %v752
    %v1036 = vunpack.c.l.b16 %v753
    %v1037 = vunpack.c.h.b16 %v753
    %v1038 = vunpack.c.l.b16 %v754
    %v1039 = vunpack.c.h.b16 %v754
    %v1040 = vunpack.c.l.b16 %v755
    %v1041 = vunpack.c.h.b16 %v755
    %v1042 = vunpack.c.l.b16 %v756
    %v1043 = vunpack.c.h.b16 %v756
    %v1044 = vunpack.c.l.b16 %v757
    %v1045 = vunpack.c.h.b16 %v757
    %v1046 = vunpack.c.l.b16 %v758
    %v1047 = vunpack.c.h.b16 %v758
    %v1048 = vunpack.c.l.b16 %v759
    %v1049 = vunpack.c.h.b16 %v759
    %v1050 = vunpack.c.l.b16 %v760
    %v1051 = vunpack.c.h.b16 %v760
    %v1052 = vunpack.c.l.b16 %v761
    %v1053 = vunpack.c.h.b16 %v761
    %v1054 = vunpack.c.l.b16 %v762
    %v1055 = vunpack.c.h.b16 %v762
    %v1056 = vunpack.c.l.b16 %v763
    %v1057 = vunpack.c.h.b16 %v763
    %v1058 = vunpack.c.l.b16 %v764
    %v1059 = vunpack.c.h.b16 %v764
    %v1060 = vunpack.c.l.b16 %v765
    %v1061 = vunpack.c.h.b16 %v765
    %v1062 = vunpack.c.l.b16 %v766
    %v1063 = vunpack.c.h.b16 %v766
    %v1064 = vunpack.c.l.b16 %v767
    %v1065 = vunpack.c.h.b16 %v767
    %v1066 = vunpack.c.l.b16 %v768
    %v1067 = vunpack.c.h.b16 %v768
    %v1068 = vunpack.c.l.b16 %v769
    %v1069 = vunpack.c.h.b16 %v769
    %v1070 = vunpack.c.l.b16 %v770
    %v1071 = vunpack.c.h.b16 %v770
    %v1072 = vunpack.c.l.b16 %v771
    %v1073 = vunpack.c.h.b16 %v771
    %v1074 = vunpack.c.l.b16 %v772
    %v1075 = vunpack.c.h.b16 %v772
    %v1076 = vunpack.c.l.b16 %v773
    %v1077 = vunpack.c.h.b16 %v773
    %v1078 = vunpack.c.l.b16 %v774
    %v1079 = vunpack.c.h.b16 %v774
    %v1080 = vunpack.c.l.b16 %v775
    %v1081 = vunpack.c.h.b16 %v775
    %v1082 = vunpack.c.l.b16 %v776
    %v1083 = vunpack.c.h.b16 %v776
    %v1084 = vunpack.c.l.b16 %v777
    %v1085 = vunpack.c.h.b16 %v777
    %v1086 = vunpack.c.l.b16 %v778
    %v1087 = vunpack.c.h.b16 %v778
    %v1088 = vunpack.c.l.b16 %v779
    %v1089 = vunpack.c.h.b16 %v779
    %v1090 = vunpack.c.l.b16 %v780
    %v1091 = vunpack.c.h.b16 %v780
    %v1092 = vunpack.c.l.b16 %v781
    %v1093 = vunpack.c.h.b16 %v781
    %v1094 = vunpack.c.l.b16 %v782
    %v1095 = vunpack.c.h.b16 %v782
    %v1096 = vunpack.c.l.b16 %v783
    %v1097 = vunpack.c.h.b16 %v783
    %v1098 = vunpack.c.l.b16 %v784
    %v1099 = vunpack.c.h.b16 %v784
    %v1100 = vunpack.c.l.b16 %v785
    %v1101 = vunpack.c.h.b16 %v785
    %v1102 = vunpack.c.l.b16 %v786
    %v1103 = vunpack.c.h.b16 %v786
    %v1104 = vunpack.c.l.b16 %v787
    %v1105 = vunpack.c.h.b16 %v787
    %v1106 = vunpack.c.l.b16 %v788
    %v1107 = vunpack.c.h.b16 %v788
    %v1108 = vunpack.c.l.b16 %v789
    %v1109 = vunpack.c.h.b16 %v789
    %v1110 = vunpack.c.l.b16 %v790
    %v1111 = vunpack.c.h.b16 %v790
    %v1112 = vunpack.c.l.b16 %v791
    %v1113 = vunpack.c.h.b16 %v791
    %v1114 = vunpack.c.l.b16 %v792
    %v1115 = vunpack.c.h.b16 %v792
    %v1116 = vunpack.c.l.b16 %v793
    %v1117 = vunpack.c.h.b16 %v793
    %v1118 = vunpack.c.l.b16 %v794
    %v1119 = vunpack.c.h.b16 %v794
    %v1120 = vunpack.c.l.b16 %v795
    %v1121 = vunpack.c.h.b16 %v795
    %v1122 = vunpack.c.l.b16 %v796
    %v1123 = vunpack.c.h.b16 %v796
    %v1124 = vunpack.c.l.b16 %v797
    %v1125 = vunpack.c.h.b16 %v797
    %v1126 = vunpack.c.l.b16 %v798
    %v1127 = vunpack.c.h.b16 %v798
    %v1128 = vunpack.c.l.b16 %v799
    %v1129 = vunpack.c.h.b16 %v799
    %v1130 = vunpack.c.l.b16 %v800
    %v1131 = vunpack.c.h.b16 %v800
    %v1132 = vunpack.c.l.b16 %v801
    %v1133 = vunpack.c.h.b16 %v801
    %v1134 = vunpack.c.l.b16 %v802
    %v1135 = vunpack.c.h.b16 %v802
    %v1136 = vunpack.c.l.b16 %v803
    %v1137 = vunpack.c.h.b16 %v803
    %v1138 = vunpack.c.l.b16 %v804
    %v1139 = vunpack.c.h.b16 %v804
    %v1140 = vunpack.c.l.b16 %v805
    %v1141 = vunpack.c.h.b16 %v805
    %v1142 = vunpack.c.l.b16 %v806
    %v1143 = vunpack.c.h.b16 %v806
    %v1144 = vunpack.c.l.b16 %v807
    %v1145 = vunpack.c.h.b16 %v807
    %v1146 = vunpack.c.l.b16 %v808
    %v1147 = vunpack.c.h.b16 %v808
    %v1148 = vunpack.c.l.b16 %v809
    %v1149 = vunpack.c.h.b16 %v809
    %v1150 = vunpack.c.l.b16 %v810
    %v1151 = vunpack.c.h.b16 %v810
    %v1152 = vunpack.c.l.b16 %v811
    %v1153 = vunpack.c.h.b16 %v811
    %v1154 = vunpack.c.l.b16 %v812
    %v1155 = vunpack.c.h.b16 %v812
    %v1156 = vunpack.c.l.b16 %v813
    %v1157 = vunpack.c.h.b16 %v813
    %v1158 = vunpack.c.l.b16 %v814
    %v1159 = vunpack.c.h.b16 %v814
    %v1160 = vunpack.c.l.b16 %v815
    %v1161 = vunpack.c.h.b16 %v815
    %v1162 = vunpack.c.l.b16 %v816
    %v1163 = vunpack.c.h.b16 %v816
    %v1164 = vunpack.c.l.b16 %v817
    %v1165 = vunpack.c.h.b16 %v817
    %v1166 = vunpack.c.l.b16 %v818
    %v1167 = vunpack.c.h.b16 %v818
    %v1168 = vunpack.c.l.b16 %v819
    %v1169 = vunpack.c.h.b16 %v819
    %v1170 = vunpack.c.l.b16 %v820
    %v1171 = vunpack.c.h.b16 %v820
    %v1172 = vunpack.c.l.b16 %v821
    %v1173 = vunpack.c.h.b16 %v821
    %v1174 = vunpack.c.l.b16 %v822
    %v1175 = vunpack.c.h.b16 %v822
    %v1176 = vunpack.c.l.b16 %v823
    %v1177 = vunpack.c.h.b16 %v823
    %v1178 = vunpack.c.l.b16 %v824
    %v1179 = vunpack.c.h.b16 %v824
    %v1180 = vunpack.c.l.b16 %v825
    %v1181 = vunpack.c.h.b16 %v825
    %v1182 = vunpack.c.l.b16 %v826
    %v1183 = vunpack.c.h.b16 %v826
    %v1184 = vunpack.c.l.b16 %v827
    %v1185 = vunpack.c.h.b16 %v827
    %v1186 = vunpack.c.l.b16 %v828
    %v1187 = vunpack.c.h.b16 %v828
    %v1188 = vunpack.c.l.b16 %v829
    %v1189 = vunpack.c.h.b16 %v829
    %v1190 = vunpack.c.l.b16 %v830
    %v1191 = vunpack.c.h.b16 %v830
    %v1192 = vunpack.c.l.b16 %v831
    %v1193 = vunpack.c.h.b16 %v831
    %v1194 = vunpack.c.l.b16 %v832
    %v1195 = vunpack.c.h.b16 %v832
    %v1196 = vunpack.c.l.b16 %v833
    %v1197 = vunpack.c.h.b16 %v833
    %v1198 = vunpack.c.l.b16 %v834
    %v1199 = vunpack.c.h.b16 %v834
    %v1200 = vunpack.c.l.b16 %v835
    %v1201 = vunpack.c.h.b16 %v835
    %v1202 = vunpack.c.l.b16 %v836
    %v1203 = vunpack.c.h.b16 %v836
    %v1204 = vunpack.c.l.b16 %v837
    %v1205 = vunpack.c.h.b16 %v837
    %v1206 = vunpack.c.l.b16 %v838
    %v1207 = vunpack.c.h.b16 %v838
    %v1208 = vunpack.c.l.b16 %v839
    %v1209 = vunpack.c.h.b16 %v839
    %v1210 = vunpack.c.l.b16 %v840
    %v1211 = vunpack.c.h.b16 %v840
    %v1212 = vunpack.c.l.b16 %v841
    %v1213 = vunpack.c.h.b16 %v841
    %v1214 = vunpack.c.l.b16 %v842
    %v1215 = vunpack.c.h.b16 %v842
    %v1216 = vunpack.c.l.b16 %v843
    %v1217 = vunpack.c.h.b16 %v843
    %v1218 = vunpack.c.l.b16 %v844
    %v1219 = vunpack.c.h.b16 %v844
    %v1220 = vunpack.c.l.b16 %v845
    %v1221 = vunpack.c.h.b16 %v845
    %v1222 = vunpack.c.l.b16 %v846
    %v1223 = vunpack.c.h.b16 %v846
    %v1224 = vunpack.c.l.b16 %v847
    %v1225 = vunpack.c.h.b16 %v847
    %v1226 = vunpack.c.l.b16 %v848
    %v1227 = vunpack.c.h.b16 %v848
    %v1228 = vunpack.c.l.b16 %v849
    %v1229 = vunpack.c.h.b16 %v849
    %v1230 = vunpack.c.l.b16 %v850
    %v1231 = vunpack.c.h.b16 %v850
    %v1232 = vunpack.c.l.b16 %v851
    %v1233 = vunpack.c.h.b16 %v851
    %v1234 = vunpack.c.l.b16 %v852
    %v1235 = vunpack.c.h.b16 %v852
    %v1236 = vunpack.c.l.b16 %v853
    %v1237 = vunpack.c.h.b16 %v853
    %v1238 = vunpack.c.l.b16 %v854
    %v1239 = vunpack.c.h.b16 %v854
    %v1240 = vunpack.c.l.b16 %v855
    %v1241 = vunpack.c.h.b16 %v855
    %v1242 = vunpack.c.l.b16 %v856
    %v1243 = vunpack.c.h.b16 %v856
    %v1244 = vunpack.c.l.b16 %v857
    %v1245 = vunpack.c.h.b16 %v857
    %v1246 = vunpack.c.l.b16 %v858
    %v1247 = vunpack.c.h.b16 %v858
    %v1248 = vunpack.c.l.b16 %v859
    %v1249 = vunpack.c.h.b16 %v859
    %v1250 = vunpack.c.l.b16 %v860
    %v1251 = vunpack.c.h.b16 %v860
    %v1252 = vunpack.c.l.b16 %v861
    %v1253 = vunpack.c.h.b16 %v861
    %v1254 = vunpack.c.l.b16 %v862
    %v1255 = vunpack.c.h.b16 %v862
    %v1256 = vunpack.c.l.b16 %v863
    %v1257 = vunpack.c.h.b16 %v863
    %v1258 = vunpack.c.l.b16 %v864
    %v1259 = vunpack.c.h.b16 %v864
    %v1260 = vunpack.c.l.b16 %v865
    %v1261 = vunpack.c.h.b16 %v865
    %v1262 = vpack.c.b16 %v1008, %v1006
    %v1263 = vpack.c.b16 %v1009, %v1007
    %v1264 = vpack.c.b16 %v1012, %v1010
    %v1265 = vpack.c.b16 %v1013, %v1011
    %v1266 = vpack.c.b16 %v1016, %v1014
    %v1267 = vpack.c.b16 %v1017, %v1015
    %v1268 = vpack.c.b16 %v1020, %v1018
    %v1269 = vpack.c.b16 %v1021, %v1019
    %v1270 = vpack.c.b16 %v1024, %v1022
    %v1271 = vpack.c.b16 %v1025, %v1023
    %v1272 = vpack.c.b16 %v1028, %v1026
    %v1273 = vpack.c.b16 %v1029, %v1027
    %v1274 = vpack.c.b16 %v1032, %v1030
    %v1275 = vpack.c.b16 %v1033, %v1031
    %v1276 = vpack.c.b16 %v1036, %v1034
    %v1277 = vpack.c.b16 %v1037, %v1035
    %v1278 = vpack.c.b16 %v1040, %v1038
    %v1279 = vpack.c.b16 %v1041, %v1039
    %v1280 = vpack.c.b16 %v1044, %v1042
    %v1281 = vpack.c.b16 %v1045, %v1043
    %v1282 = vpack.c.b16 %v1048, %v1046
    %v1283 = vpack.c.b16 %v1049, %v1047
    %v1284 = vpack.c.b16 %v1052, %v1050
    %v1285 = vpack.c.b16 %v1053, %v1051
    %v1286 = vpack.c.b16 %v1056, %v1054
    %v1287 = vpack.c.b16 %v1057, %v1055
    %v1288 = vpack.c.b16 %v1060, %v1058
    %v1289 = vpack.c.b16 %v1061, %v1059
    %v1290 = vpack.c.b16 %v1064, %v1062
    %v1291 = vpack.c.b16 %v1065, %v1063
    %v1292 = vpack.c.b16 %v1068, %v1066
    %v1293 = vpack.c.b16 %v1069, %v1067
    %v1294 = vpack.c.b16 %v1072, %v1070
    %v1295 = vpack.c.b16 %v1073, %v1071
    %v1296 = vpack.c.b16 %v1076, %v1074
    %v1297 = vpack.c.b16 %v1077, %v1075
    %v1298 = vpack.c.b16 %v1080, %v1078
    %v1299 = vpack.c.b16 %v1081, %v1079
    %v1300 = vpack.c.b16 %v1084, %v1082
    %v1301 = vpack.c.b16 %v1085, %v1083
    %v1302 = vpack.c.b16 %v1088, %v1086
    %v1303 = vpack.c.b16 %v1089, %v1087
    %v1304 = vpack.c.b16 %v1092, %v1090
    %v1305 = vpack.c.b16 %v1093, %v1091
    %v1306 = vpack.c.b16 %v1096, %v1094
    %v1307 = vpack.c.b16 %v1097, %v1095
    %v1308 = vpack.c.b16 %v1100, %v1098
    %v1309 = vpack.c.b16 %v1101, %v1099
    %v1310 = vpack.c.b16 %v1104, %v1102
    %v1311 = vpack.c.b16 %v1105, %v1103
    %v1312 = vpack.c.b16 %v1108, %v1106
    %v1313 = vpack.c.b16 %v1109, %v1107
    %v1314 = vpack.c.b16 %v1112, %v1110
    %v1315 = vpack.c.b16 %v1113, %v1111
    %v1316 = vpack.c.b16 %v1116, %v1114
    %v1317 = vpack.c.b16 %v1117, %v1115
    %v1318 = vpack.c.b16 %v1120, %v1118
    %v1319 = vpack.c.b16 %v1121, %v1119
    %v1320 = vpack.c.b16 %v1124, %v1122
    %v1321 = vpack.c.b16 %v1125, %v1123
    %v1322 = vpack.c.b16 %v1128, %v1126
    %v1323 = vpack.c.b16 %v1129, %v1127
    %v1324 = vpack.c.b16 %v1132, %v1130
    %v1325 = vpack.c.b16 %v1133, %v1131
    %v1326 = vpack.c.b16 %v1136, %v1134
    %v1327 = vpack.c.b16 %v1137, %v1135
    %v1328 = vpack.c.b16 %v1140, %v1138
    %v1329 = vpack.c.b16 %v1141, %v1139
    %v1330 = vpack.c.b16 %v1144, %v1142
    %v1331 = vpack.c.b16 %v1145, %v1143
    %v1332 = vpack.c.b16 %v1148, %v1146
    %v1333 = vpack.c.b16 %v1149, %v1147
    %v1334 = vpack.c.b16 %v1152, %v1150
    %v1335 = vpack.c.b16 %v1153, %v1151
    %v1336 = vpack.c.b16 %v1156, %v1154
    %v1337 = vpack.c.b16 %v1157, %v1155
    %v1338 = vpack.c.b16 %v1160, %v1158
    %v1339 = vpack.c.b16 %v1161, %v1159
    %v1340 = vpack.c.b16 %v1164, %v1162
    %v1341 = vpack.c.b16 %v1165, %v1163
    %v1342 = vpack.c.b16 %v1168, %v1166
    %v1343 = vpack.c.b16 %v1169, %v1167
    %v1344 = vpack.c.b16 %v1172, %v1170
    %v1345 = vpack.c.b16 %v1173, %v1171
    %v1346 = vpack.c.b16 %v1176, %v1174
    %v1347 = vpack.c.b16 %v1177, %v1175
    %v1348 = vpack.c.b16 %v1180, %v1178
    %v1349 = vpack.c.b16 %v1181, %v1179
    %v1350 = vpack.c.b16 %v1184, %v1182
    %v1351 = vpack.c.b16 %v1185, %v1183
    %v1352 = vpack.c.b16 %v1188, %v1186
    %v1353 = vpack.c.b16 %v1189, %v1187
    %v1354 = vpack.c.b16 %v1192, %v1190
    %v1355 = vpack.c.b16 %v1193, %v1191
    %v1356 = vpack.c.b16 %v1196, %v1194
    %v1357 = vpack.c.b16 %v1197, %v1195
    %v1358 = vpack.c.b16 %v1200, %v1198
    %v1359 = vpack.c.b16 %v1201, %v1199
    %v1360 = vpack.c.b16 %v1204, %v1202
    %v1361 = vpack.c.b16 %v1205, %v1203
    %v1362 = vpack.c.b16 %v1208, %v1206
    %v1363 = vpack.c.b16 %v1209, %v1207
    %v1364 = vpack.c.b16 %v1212, %v1210
    %v1365 = vpack.c.b16 %v1213, %v1211
    %v1366 = vpack.c.b16 %v1216, %v1214
    %v1367 = vpack.c.b16 %v1217, %v1215
    %v1368 = vpack.c.b16 %v1220, %v1218
    %v1369 = vpack.c.b16 %v1221, %v1219
    %v1370 = vpack.c.b16 %v1224, %v1222
    %v1371 = vpack.c.b16 %v1225, %v1223
    %v1372 = vpack.c.b16 %v1228, %v1226
    %v1373 = vpack.c.b16 %v1229, %v1227
    %v1374 = vpack.c.b16 %v1232, %v1230
    %v1375 = vpack.c.b16 %v1233, %v1231
    %v1376 = vpack.c.b16 %v1236, %v1234
    %v1377 = vpack.c.b16 %v1237, %v1235
    %v1378 = vpack.c.b16 %v1240, %v1238
    %v1379 = vpack.c.b16 %v1241, %v1239
    %v1380 = vpack.c.b16 %v1244, %v1242
    %v1381 = vpack.c.b16 %v1245, %v1243
    %v1382 = vpack.c.b16 %v1248, %v1246
    %v1383 = vpack.c.b16 %v1249, %v1247
    %v1384 = vpack.c.b16 %v1252, %v1250
    %v1385 = vpack.c.b16 %v1253, %v1251
    %v1386 = vpack.c.b16 %v1256, %v1254
    %v1387 = vpack.c.b16 %v1257, %v1255
    %v1388 = vpack.c.b16 %v1260, %v1258
    %v1389 = vpack.c.b16 %v1261, %v1259
    %1518 = vmatprep.subr.bf16.mxu0 %v1277
    %1519 = vmatpush1.bf16.msra.mxu0 %v1276
    %1520 = vmatprep.subr.bf16.mxu0 %v1275
    %1521 = vmatpush1.bf16.msra.mxu0 %v1274
    %1522 = vmatprep.subr.bf16.mxu0 %v1273
    %1523 = vmatpush1.bf16.msra.mxu0 %v1272
    %1524 = vmatprep.subr.bf16.mxu0 %v1271
    %1525 = vmatpush1.bf16.msra.mxu0 %v1270
    %1526 = vmatprep.subr.bf16.mxu0 %v1269
    %1527 = vmatpush1.bf16.msra.mxu0 %v1268
    %1528 = vmatprep.subr.bf16.mxu0 %v1267
    %1529 = vmatpush1.bf16.msra.mxu0 %v1266
    %1530 = vmatprep.subr.bf16.mxu0 %v1265
    %1531 = vmatpush1.bf16.msra.mxu0 %v1264
    %1532 = vmatprep.subr.bf16.mxu0 %v1263
    %1533 = vmatpush1.bf16.msra.mxu0 %v1262
    %1534 = vmatprep.subr.bf16.mxu0 %v1293
    %1535 = vmatpush2.bf16.msra.mxu0 %v1292
    %1536 = vmatprep.subr.bf16.mxu0 %v1291
    %1537 = vmatpush2.bf16.msra.mxu0 %v1290
    %1538 = vmatprep.subr.bf16.mxu0 %v1289
    %1539 = vmatpush2.bf16.msra.mxu0 %v1288
    %1540 = vmatprep.subr.bf16.mxu0 %v1287
    %1541 = vmatpush2.bf16.msra.mxu0 %v1286
    %1542 = vmatprep.subr.bf16.mxu0 %v1285
    %1543 = vmatpush2.bf16.msra.mxu0 %v1284
    %1544 = vmatprep.subr.bf16.mxu0 %v1283
    %1545 = vmatpush2.bf16.msra.mxu0 %v1282
    %1546 = vmatprep.subr.bf16.mxu0 %v1281
    %1547 = vmatpush2.bf16.msra.mxu0 %v1280
    %1548 = vmatprep.subr.bf16.mxu0 %v1279
    %1549 = vmatpush2.bf16.msra.mxu0 %v1278
    %1550 = vmatprep.mubr.bf16.mxu0 %v731
    %1551 = vmatmul.mubr.bf16.gmra.mxu0 %v730
    %v1552 = vpop.f32.mrf.mxu0
    %v1553 = vadd.f32 %v871, %v1552
    %v1554 = vpop.f32.mrf.mxu0
    %v1555 = vadd.f32 %v875, %v1554
    %v1556 = vpop.f32.mrf.mxu0
    %v1557 = vpop.f32.mrf.mxu0
    %1558 = vdwg.mxu0
    %1559 = vmatprep.subr.bf16.mxu0 %v1309
    %1560 = vmatpush1.bf16.msra.mxu0 %v1308
    %1561 = vmatprep.subr.bf16.mxu0 %v1307
    %1562 = vmatpush1.bf16.msra.mxu0 %v1306
    %1563 = vmatprep.subr.bf16.mxu0 %v1305
    %1564 = vmatpush1.bf16.msra.mxu0 %v1304
    %1565 = vmatprep.subr.bf16.mxu0 %v1303
    %1566 = vmatpush1.bf16.msra.mxu0 %v1302
    %1567 = vmatprep.subr.bf16.mxu0 %v1301
    %1568 = vmatpush1.bf16.msra.mxu0 %v1300
    %1569 = vmatprep.subr.bf16.mxu0 %v1299
    %1570 = vmatpush1.bf16.msra.mxu0 %v1298
    %1571 = vmatprep.subr.bf16.mxu0 %v1297
    %1572 = vmatpush1.bf16.msra.mxu0 %v1296
    %1573 = vmatprep.subr.bf16.mxu0 %v1295
    %1574 = vmatpush1.bf16.msra.mxu0 %v1294
    %1575 = vmatprep.subr.bf16.mxu0 %v1325
    %1576 = vmatpush2.bf16.msra.mxu0 %v1324
    %1577 = vmatprep.subr.bf16.mxu0 %v1323
    %1578 = vmatpush2.bf16.msra.mxu0 %v1322
    %1579 = vmatprep.subr.bf16.mxu0 %v1321
    %1580 = vmatpush2.bf16.msra.mxu0 %v1320
    %1581 = vmatprep.subr.bf16.mxu0 %v1319
    %1582 = vmatpush2.bf16.msra.mxu0 %v1318
    %1583 = vmatprep.subr.bf16.mxu0 %v1317
    %1584 = vmatpush2.bf16.msra.mxu0 %v1316
    %1585 = vmatprep.subr.bf16.mxu0 %v1315
    %1586 = vmatpush2.bf16.msra.mxu0 %v1314
    %1587 = vmatprep.subr.bf16.mxu0 %v1313
    %1588 = vmatpush2.bf16.msra.mxu0 %v1312
    %1589 = vmatprep.subr.bf16.mxu0 %v1311
    %1590 = vmatpush2.bf16.msra.mxu0 %v1310
    %1591 = vmatprep.mubr.bf16.mxu0 %v733
    %1592 = vmatmul.mubr.bf16.gmra.mxu0 %v732
    %v1593 = vpop.f32.mrf.mxu0
    %v1594 = vadd.f32 %v1553, %v1593
    %v1595 = vpop.f32.mrf.mxu0
    %v1596 = vadd.f32 %v1555, %v1595
    %v1597 = vpop.f32.mrf.mxu0
    %v1598 = vpop.f32.mrf.mxu0
    %1599 = vdwg.mxu0
    %1600 = vmatprep.subr.bf16.mxu0 %v1341
    %1601 = vmatpush1.bf16.msra.mxu0 %v1340
    %1602 = vmatprep.subr.bf16.mxu0 %v1339
    %1603 = vmatpush1.bf16.msra.mxu0 %v1338
    %1604 = vmatprep.subr.bf16.mxu0 %v1337
    %1605 = vmatpush1.bf16.msra.mxu0 %v1336
    %1606 = vmatprep.subr.bf16.mxu0 %v1335
    %1607 = vmatpush1.bf16.msra.mxu0 %v1334
    %1608 = vmatprep.subr.bf16.mxu0 %v1333
    %1609 = vmatpush1.bf16.msra.mxu0 %v1332
    %1610 = vmatprep.subr.bf16.mxu0 %v1331
    %1611 = vmatpush1.bf16.msra.mxu0 %v1330
    %1612 = vmatprep.subr.bf16.mxu0 %v1329
    %1613 = vmatpush1.bf16.msra.mxu0 %v1328
    %1614 = vmatprep.subr.bf16.mxu0 %v1327
    %1615 = vmatpush1.bf16.msra.mxu0 %v1326
    %1616 = vmatprep.subr.bf16.mxu0 %v1357
    %1617 = vmatpush2.bf16.msra.mxu0 %v1356
    %1618 = vmatprep.subr.bf16.mxu0 %v1355
    %1619 = vmatpush2.bf16.msra.mxu0 %v1354
    %1620 = vmatprep.subr.bf16.mxu0 %v1353
    %1621 = vmatpush2.bf16.msra.mxu0 %v1352
    %1622 = vmatprep.subr.bf16.mxu0 %v1351
    %1623 = vmatpush2.bf16.msra.mxu0 %v1350
    %1624 = vmatprep.subr.bf16.mxu0 %v1349
    %1625 = vmatpush2.bf16.msra.mxu0 %v1348
    %1626 = vmatprep.subr.bf16.mxu0 %v1347
    %1627 = vmatpush2.bf16.msra.mxu0 %v1346
    %1628 = vmatprep.subr.bf16.mxu0 %v1345
    %1629 = vmatpush2.bf16.msra.mxu0 %v1344
    %1630 = vmatprep.subr.bf16.mxu0 %v1343
    %1631 = vmatpush2.bf16.msra.mxu0 %v1342
    %1632 = vmatprep.mubr.bf16.mxu0 %v735
    %1633 = vmatmul.mubr.bf16.gmra.mxu0 %v734
    %v1634 = vpop.f32.mrf.mxu0
    %v1635 = vadd.f32 %v1594, %v1634
    %v1636 = vpop.f32.mrf.mxu0
    %v1637 = vadd.f32 %v1596, %v1636
    %v1638 = vpop.f32.mrf.mxu0
    %v1639 = vpop.f32.mrf.mxu0
    %1640 = vdwg.mxu0
    %1641 = vmatprep.subr.bf16.mxu0 %v1373
    %1642 = vmatpush1.bf16.msra.mxu0 %v1372
    %1643 = vmatprep.subr.bf16.mxu0 %v1371
    %1644 = vmatpush1.bf16.msra.mxu0 %v1370
    %1645 = vmatprep.subr.bf16.mxu0 %v1369
    %1646 = vmatpush1.bf16.msra.mxu0 %v1368
    %1647 = vmatprep.subr.bf16.mxu0 %v1367
    %1648 = vmatpush1.bf16.msra.mxu0 %v1366
    %1649 = vmatprep.subr.bf16.mxu0 %v1365
    %1650 = vmatpush1.bf16.msra.mxu0 %v1364
    %1651 = vmatprep.subr.bf16.mxu0 %v1363
    %1652 = vmatpush1.bf16.msra.mxu0 %v1362
    %1653 = vmatprep.subr.bf16.mxu0 %v1361
    %1654 = vmatpush1.bf16.msra.mxu0 %v1360
    %1655 = vmatprep.subr.bf16.mxu0 %v1359
    %1656 = vmatpush1.bf16.msra.mxu0 %v1358
    %1657 = vmatprep.subr.bf16.mxu0 %v1389
    %1658 = vmatpush2.bf16.msra.mxu0 %v1388
    %1659 = vmatprep.subr.bf16.mxu0 %v1387
    %1660 = vmatpush2.bf16.msra.mxu0 %v1386
    %1661 = vmatprep.subr.bf16.mxu0 %v1385
    %1662 = vmatpush2.bf16.msra.mxu0 %v1384
    %1663 = vmatprep.subr.bf16.mxu0 %v1383
    %1664 = vmatpush2.bf16.msra.mxu0 %v1382
    %1665 = vmatprep.subr.bf16.mxu0 %v1381
    %1666 = vmatpush2.bf16.msra.mxu0 %v1380
    %1667 = vmatprep.subr.bf16.mxu0 %v1379
    %1668 = vmatpush2.bf16.msra.mxu0 %v1378
    %1669 = vmatprep.subr.bf16.mxu0 %v1377
    %1670 = vmatpush2.bf16.msra.mxu0 %v1376
    %1671 = vmatprep.subr.bf16.mxu0 %v1375
    %1672 = vmatpush2.bf16.msra.mxu0 %v1374
    %1673 = vmatprep.mubr.bf16.mxu0 %v737
    %1674 = vmatmul.mubr.bf16.gmra.mxu0 %v736
    %v1675 = vpop.f32.mrf.mxu0
    %v1676 = vadd.f32 %v1635, %v1675
    %v1677 = vpop.f32.mrf.mxu0
    %v1678 = vadd.f32 %v1637, %v1677
    %v1679 = vpop.f32.mrf.mxu0
    %v1680 = vpop.f32.mrf.mxu0
    %1681 = vdwg.mxu0
    %v1682 = vmax.f32 %v1676, 0.0
    %v1683 = vmax.f32 %v1678, 0.0
    %v1684 = vpack.c.bf16 %v1682, %v1682
    %v1685 = vpack.c.bf16 %v1683, %v1683
    %v1686 = vld [vmem:[#allocation10] sm:$0xf]
    %v1687 = vld [vmem:[#allocation10 + $0x4] sm:$0xf]
    %v1688 = vld [vmem:[#allocation10 + $0x8] sm:$0xf]
    %v1689 = vld [vmem:[#allocation10 + $0xc] sm:$0xf]
    %v1690 = vld [vmem:[#allocation10 + $0x10] sm:$0xf]
    %v1691 = vld [vmem:[#allocation10 + $0x14] sm:$0xf]
    %v1692 = vld [vmem:[#allocation10 + $0x18] sm:$0xf]
    %v1693 = vld [vmem:[#allocation10 + $0x1c] sm:$0xf]
    %v1694 = vld [vmem:[#allocation10 + $0x20] sm:$0xf]
    %v1695 = vld [vmem:[#allocation10 + $0x24] sm:$0xf]
    %v1696 = vld [vmem:[#allocation10 + $0x28] sm:$0xf]
    %v1697 = vld [vmem:[#allocation10 + $0x2c] sm:$0xf]
    %v1698 = vld [vmem:[#allocation10 + $0x30] sm:$0xf]
    %v1699 = vld [vmem:[#allocation10 + $0x34] sm:$0xf]
    %v1700 = vld [vmem:[#allocation10 + $0x38] sm:$0xf]
    %v1701 = vld [vmem:[#allocation10 + $0x3c] sm:$0xf]
    %v1702 = vld [vmem:[#allocation10 + $0x40] sm:$0xf]
    %v1703 = vld [vmem:[#allocation10 + $0x44] sm:$0xf]
    %v1704 = vld [vmem:[#allocation10 + $0x48] sm:$0xf]
    %v1705 = vld [vmem:[#allocation10 + $0x4c] sm:$0xf]
    %v1706 = vld [vmem:[#allocation10 + $0x50] sm:$0xf]
    %v1707 = vld [vmem:[#allocation10 + $0x54] sm:$0xf]
    %v1708 = vld [vmem:[#allocation10 + $0x58] sm:$0xf]
    %v1709 = vld [vmem:[#allocation10 + $0x5c] sm:$0xf]
    %v1710 = vld [vmem:[#allocation10 + $0x60] sm:$0xf]
    %v1711 = vld [vmem:[#allocation10 + $0x64] sm:$0xf]
    %v1712 = vld [vmem:[#allocation10 + $0x68] sm:$0xf]
    %v1713 = vld [vmem:[#allocation10 + $0x6c] sm:$0xf]
    %v1714 = vld [vmem:[#allocation10 + $0x70] sm:$0xf]
    %v1715 = vld [vmem:[#allocation10 + $0x74] sm:$0xf]
    %v1716 = vld [vmem:[#allocation10 + $0x78] sm:$0xf]
    %v1717 = vld [vmem:[#allocation10 + $0x7c] sm:$0xf]
    %v1718 = vld [vmem:[%s6] sm:$0x1]
    %v1720 = vlaneseq
    %v1721 = vshrl.u32 %v1720, 7
    %v1722 = vsub.s32 0, %v1721
    %v1723 = vrot.slane %v1718, %v1722
    %v1757 = vunpack.c.l.b16 %v1686
    %v1758 = vunpack.c.l.b16 %v1687
    %v1759 = vunpack.c.l.b16 %v1688
    %v1760 = vunpack.c.l.b16 %v1689
    %v1761 = vunpack.c.l.b16 %v1690
    %v1762 = vunpack.c.l.b16 %v1691
    %v1763 = vunpack.c.l.b16 %v1692
    %v1764 = vunpack.c.l.b16 %v1693
    %v1765 = vunpack.c.l.b16 %v1694
    %v1766 = vunpack.c.l.b16 %v1695
    %v1767 = vunpack.c.l.b16 %v1696
    %v1768 = vunpack.c.l.b16 %v1697
    %v1769 = vunpack.c.l.b16 %v1698
    %v1770 = vunpack.c.l.b16 %v1699
    %v1771 = vunpack.c.l.b16 %v1700
    %v1772 = vunpack.c.l.b16 %v1701
    %v1773 = vunpack.c.l.b16 %v1702
    %v1774 = vunpack.c.l.b16 %v1703
    %v1775 = vunpack.c.l.b16 %v1704
    %v1776 = vunpack.c.l.b16 %v1705
    %v1777 = vunpack.c.l.b16 %v1706
    %v1778 = vunpack.c.l.b16 %v1707
    %v1779 = vunpack.c.l.b16 %v1708
    %v1780 = vunpack.c.l.b16 %v1709
    %v1781 = vunpack.c.l.b16 %v1710
    %v1782 = vunpack.c.l.b16 %v1711
    %v1783 = vunpack.c.l.b16 %v1712
    %v1784 = vunpack.c.l.b16 %v1713
    %v1785 = vunpack.c.l.b16 %v1714
    %v1786 = vunpack.c.l.b16 %v1715
    %v1787 = vunpack.c.l.b16 %v1716
    %v1788 = vunpack.c.l.b16 %v1717
    %v1789 = vpack.c.b16 %v1758, %v1757
    %v1790 = vpack.c.b16 %v1760, %v1759
    %v1791 = vpack.c.b16 %v1762, %v1761
    %v1792 = vpack.c.b16 %v1764, %v1763
    %v1793 = vpack.c.b16 %v1766, %v1765
    %v1794 = vpack.c.b16 %v1768, %v1767
    %v1795 = vpack.c.b16 %v1770, %v1769
    %v1796 = vpack.c.b16 %v1772, %v1771
    %v1797 = vpack.c.b16 %v1774, %v1773
    %v1798 = vpack.c.b16 %v1776, %v1775
    %v1799 = vpack.c.b16 %v1778, %v1777
    %v1800 = vpack.c.b16 %v1780, %v1779
    %v1801 = vpack.c.b16 %v1782, %v1781
    %v1802 = vpack.c.b16 %v1784, %v1783
    %v1803 = vpack.c.b16 %v1786, %v1785
    %v1804 = vpack.c.b16 %v1788, %v1787
    %1821 = vmatprep.subr.bf16.mxu0 0
    %1822 = vmatpush1.bf16.msra.mxu0 %v1796
    %1823 = vmatprep.subr.bf16.mxu0 0
    %1824 = vmatpush1.bf16.msra.mxu0 %v1795
    %1825 = vmatprep.subr.bf16.mxu0 0
    %1826 = vmatpush1.bf16.msra.mxu0 %v1794
    %1827 = vmatprep.subr.bf16.mxu0 0
    %1828 = vmatpush1.bf16.msra.mxu0 %v1793
    %1829 = vmatprep.subr.bf16.mxu0 0
    %1830 = vmatpush1.bf16.msra.mxu0 %v1792
    %1831 = vmatprep.subr.bf16.mxu0 0
    %1832 = vmatpush1.bf16.msra.mxu0 %v1791
    %1833 = vmatprep.subr.bf16.mxu0 0
    %1834 = vmatpush1.bf16.msra.mxu0 %v1790
    %1835 = vmatprep.subr.bf16.mxu0 0
    %1836 = vmatpush1.bf16.msra.mxu0 %v1789
    %1837 = vmatprep.subr.bf16.mxu0 0
    %1838 = vmatpush2.bf16.msra.mxu0 %v1804
    %1839 = vmatprep.subr.bf16.mxu0 0
    %1840 = vmatpush2.bf16.msra.mxu0 %v1803
    %1841 = vmatprep.subr.bf16.mxu0 0
    %1842 = vmatpush2.bf16.msra.mxu0 %v1802
    %1843 = vmatprep.subr.bf16.mxu0 0
    %1844 = vmatpush2.bf16.msra.mxu0 %v1801
    %1845 = vmatprep.subr.bf16.mxu0 0
    %1846 = vmatpush2.bf16.msra.mxu0 %v1800
    %1847 = vmatprep.subr.bf16.mxu0 0
    %1848 = vmatpush2.bf16.msra.mxu0 %v1799
    %1849 = vmatprep.subr.bf16.mxu0 0
    %1850 = vmatpush2.bf16.msra.mxu0 %v1798
    %1851 = vmatprep.subr.bf16.mxu0 0
    %1852 = vmatpush2.bf16.msra.mxu0 %v1797
    %1853 = vmatprep.mubr.bf16.mxu0 %v1685
    %1854 = vmatmul.mubr.bf16.gmra.mxu0 %v1684
    %v1855 = vpop.f32.mrf.mxu0
    %v1856 = vadd.f32 %v1723, %v1855
    %v1857 = vpop.f32.mrf.mxu0
    %v1858 = vpop.f32.mrf.mxu0
    %v1859 = vpop.f32.mrf.mxu0
    %1860 = vdwg.mxu0
    %v1861 = vmax.f32 %v1856, 0.0
    %v1862 = vpack.c.bf16 %v1861, %v1861
    %v1863 = vld [vmem:[#allocation11] sm:$0xf]
    %v1864 = vld [vmem:[#allocation11 + $0x4] sm:$0xf]
    %v1865 = vld [vmem:[#allocation11 + $0x8] sm:$0xf]
    %v1866 = vld [vmem:[#allocation11 + $0xc] sm:$0xf]
    %v1867 = vld [vmem:[#allocation11 + $0x10] sm:$0xf]
    %v1868 = vld [vmem:[#allocation11 + $0x14] sm:$0xf]
    %v1869 = vld [vmem:[#allocation11 + $0x18] sm:$0xf]
    %v1870 = vld [vmem:[#allocation11 + $0x1c] sm:$0xf]
    %v1871 = vld [vmem:[#allocation11 + $0x20] sm:$0xf]
    %v1872 = vld [vmem:[#allocation11 + $0x24] sm:$0xf]
    %v1873 = vld [vmem:[#allocation11 + $0x28] sm:$0xf]
    %v1874 = vld [vmem:[#allocation11 + $0x2c] sm:$0xf]
    %v1875 = vld [vmem:[#allocation11 + $0x30] sm:$0xf]
    %v1876 = vld [vmem:[#allocation11 + $0x34] sm:$0xf]
    %v1877 = vld [vmem:[#allocation11 + $0x38] sm:$0xf]
    %v1878 = vld [vmem:[#allocation11 + $0x3c] sm:$0xf]
    %v1879 = vld [vmem:[%s8] sm:$0x1]
    %v1881 = vlaneseq
    %v1882 = vshrl.u32 %v1881, 7
    %v1883 = vsub.s32 0, %v1882
    %v1884 = vrot.slane %v1879, %v1883
    %v1902 = vunpack.c.l.b16 %v1863
    %v1903 = vunpack.c.l.b16 %v1864
    %v1904 = vunpack.c.l.b16 %v1865
    %v1905 = vunpack.c.l.b16 %v1866
    %v1906 = vunpack.c.l.b16 %v1867
    %v1907 = vunpack.c.l.b16 %v1868
    %v1908 = vunpack.c.l.b16 %v1869
    %v1909 = vunpack.c.l.b16 %v1870
    %v1910 = vunpack.c.l.b16 %v1871
    %v1911 = vunpack.c.l.b16 %v1872
    %v1912 = vunpack.c.l.b16 %v1873
    %v1913 = vunpack.c.l.b16 %v1874
    %v1914 = vunpack.c.l.b16 %v1875
    %v1915 = vunpack.c.l.b16 %v1876
    %v1916 = vunpack.c.l.b16 %v1877
    %v1917 = vunpack.c.l.b16 %v1878
    %v1918 = vpack.c.b16 %v1903, %v1902
    %v1919 = vpack.c.b16 %v1905, %v1904
    %v1920 = vpack.c.b16 %v1907, %v1906
    %v1921 = vpack.c.b16 %v1909, %v1908
    %v1922 = vpack.c.b16 %v1911, %v1910
    %v1923 = vpack.c.b16 %v1913, %v1912
    %v1924 = vpack.c.b16 %v1915, %v1914
    %v1925 = vpack.c.b16 %v1917, %v1916
    %1934 = vmatprep.subr.bf16.mxu0 0
    %1935 = vmatpush1.bf16.msra.mxu0 %v1925
    %1936 = vmatprep.subr.bf16.mxu0 0
    %1937 = vmatpush1.bf16.msra.mxu0 %v1924
    %1938 = vmatprep.subr.bf16.mxu0 0
    %1939 = vmatpush1.bf16.msra.mxu0 %v1923
    %1940 = vmatprep.subr.bf16.mxu0 0
    %1941 = vmatpush1.bf16.msra.mxu0 %v1922
    %1942 = vmatprep.subr.bf16.mxu0 0
    %1943 = vmatpush1.bf16.msra.mxu0 %v1921
    %1944 = vmatprep.subr.bf16.mxu0 0
    %1945 = vmatpush1.bf16.msra.mxu0 %v1920
    %1946 = vmatprep.subr.bf16.mxu0 0
    %1947 = vmatpush1.bf16.msra.mxu0 %v1919
    %1948 = vmatprep.subr.bf16.mxu0 0
    %1949 = vmatpush1.bf16.msra.mxu0 %v1918
    %1950 = vmatprep.subr.bf16.mxu0 0
    %1951 = vmatpush2.bf16.msra.mxu0 0
    %1952 = vmatprep.subr.bf16.mxu0 0
    %1953 = vmatpush2.bf16.msra.mxu0 0
    %1954 = vmatprep.subr.bf16.mxu0 0
    %1955 = vmatpush2.bf16.msra.mxu0 0
    %1956 = vmatprep.subr.bf16.mxu0 0
    %1957 = vmatpush2.bf16.msra.mxu0 0
    %1958 = vmatprep.subr.bf16.mxu0 0
    %1959 = vmatpush2.bf16.msra.mxu0 0
    %1960 = vmatprep.subr.bf16.mxu0 0
    %1961 = vmatpush2.bf16.msra.mxu0 0
    %1962 = vmatprep.subr.bf16.mxu0 0
    %1963 = vmatpush2.bf16.msra.mxu0 0
    %1964 = vmatprep.subr.bf16.mxu0 0
    %1965 = vmatpush2.bf16.msra.mxu0 0
    %1966 = vmatprep.mubr.bf16.mxu0 0
    %1967 = vmatmul.mubr.bf16.gmra.mxu0 %v1862
    %v1968 = vpop.f32.mrf.mxu0
    %v1969 = vadd.f32 %v1884, %v1968
    %v1970 = vpop.f32.mrf.mxu0
    %v1971 = vpop.f32.mrf.mxu0
    %v1972 = vpop.f32.mrf.mxu0
    %1973 = vdwg.mxu0
    %v1974 = vmax.f32 %v1969, 0.0
    %v1975 = vpack.c.bf16 %v1974, %v1974
    %v1976 = vld [vmem:[#allocation13] sm:$0xf]
    %v1977 = vld [vmem:[#allocation13 + $0x4] sm:$0xf]
    %v1978 = vld [vmem:[#allocation13 + $0x8] sm:$0xf]
    %v1979 = vld [vmem:[#allocation13 + $0xc] sm:$0xf]
    %v1980 = vld [vmem:[#allocation13 + $0x10] sm:$0xf]
    %v1981 = vld [vmem:[#allocation13 + $0x14] sm:$0xf]
    %v1982 = vld [vmem:[#allocation13 + $0x18] sm:$0xf]
    %v1983 = vld [vmem:[#allocation13 + $0x1c] sm:$0xf]
    %v1984 = vld [vmem:[#allocation13 + $0x20] sm:$0xf]
    %v1985 = vld [vmem:[#allocation13 + $0x24] sm:$0xf]
    %v1986 = vld [vmem:[#allocation13 + $0x28] sm:$0xf]
    %v1987 = vld [vmem:[#allocation13 + $0x2c] sm:$0xf]
    %v1988 = vld [vmem:[#allocation13 + $0x30] sm:$0xf]
    %v1989 = vld [vmem:[#allocation13 + $0x34] sm:$0xf]
    %v1990 = vld [vmem:[#allocation13 + $0x38] sm:$0xf]
    %v1991 = vld [vmem:[#allocation13 + $0x3c] sm:$0xf]
    %v1992 = vld [vmem:[%s10] sm:$0x1]
    %v1994 = vlaneseq
    %v1995 = vshrl.u32 %v1994, 7
    %v1996 = vsub.s32 0, %v1995
    %v1997 = vrot.slane %v1992, %v1996
    %v2015 = vunpack.c.l.b16 %v1976
    %v2016 = vunpack.c.l.b16 %v1977
    %v2017 = vunpack.c.l.b16 %v1978
    %v2018 = vunpack.c.l.b16 %v1979
    %v2019 = vunpack.c.l.b16 %v1980
    %v2020 = vunpack.c.l.b16 %v1981
    %v2021 = vunpack.c.l.b16 %v1982
    %v2022 = vunpack.c.l.b16 %v1983
    %v2023 = vunpack.c.l.b16 %v1984
    %v2024 = vunpack.c.l.b16 %v1985
    %v2025 = vunpack.c.l.b16 %v1986
    %v2026 = vunpack.c.l.b16 %v1987
    %v2027 = vunpack.c.l.b16 %v1988
    %v2028 = vunpack.c.l.b16 %v1989
    %v2029 = vunpack.c.l.b16 %v1990
    %v2030 = vunpack.c.l.b16 %v1991
    %v2031 = vpack.c.b16 %v2016, %v2015
    %v2032 = vpack.c.b16 %v2018, %v2017
    %v2033 = vpack.c.b16 %v2020, %v2019
    %v2034 = vpack.c.b16 %v2022, %v2021
    %v2035 = vpack.c.b16 %v2024, %v2023
    %v2036 = vpack.c.b16 %v2026, %v2025
    %v2037 = vpack.c.b16 %v2028, %v2027
    %v2038 = vpack.c.b16 %v2030, %v2029
    %2047 = vmatprep.subr.bf16.mxu0 0
    %2048 = vmatpush1.bf16.msra.mxu0 %v2038
    %2049 = vmatprep.subr.bf16.mxu0 0
    %2050 = vmatpush1.bf16.msra.mxu0 %v2037
    %2051 = vmatprep.subr.bf16.mxu0 0
    %2052 = vmatpush1.bf16.msra.mxu0 %v2036
    %2053 = vmatprep.subr.bf16.mxu0 0
    %2054 = vmatpush1.bf16.msra.mxu0 %v2035
    %2055 = vmatprep.subr.bf16.mxu0 0
    %2056 = vmatpush1.bf16.msra.mxu0 %v2034
    %2057 = vmatprep.subr.bf16.mxu0 0
    %2058 = vmatpush1.bf16.msra.mxu0 %v2033
    %2059 = vmatprep.subr.bf16.mxu0 0
    %2060 = vmatpush1.bf16.msra.mxu0 %v2032
    %2061 = vmatprep.subr.bf16.mxu0 0
    %2062 = vmatpush1.bf16.msra.mxu0 %v2031
    %2063 = vmatprep.subr.bf16.mxu0 0
    %2064 = vmatpush2.bf16.msra.mxu0 0
    %2065 = vmatprep.subr.bf16.mxu0 0
    %2066 = vmatpush2.bf16.msra.mxu0 0
    %2067 = vmatprep.subr.bf16.mxu0 0
    %2068 = vmatpush2.bf16.msra.mxu0 0
    %2069 = vmatprep.subr.bf16.mxu0 0
    %2070 = vmatpush2.bf16.msra.mxu0 0
    %2071 = vmatprep.subr.bf16.mxu0 0
    %2072 = vmatpush2.bf16.msra.mxu0 0
    %2073 = vmatprep.subr.bf16.mxu0 0
    %2074 = vmatpush2.bf16.msra.mxu0 0
    %2075 = vmatprep.subr.bf16.mxu0 0
    %2076 = vmatpush2.bf16.msra.mxu0 0
    %2077 = vmatprep.subr.bf16.mxu0 0
    %2078 = vmatpush2.bf16.msra.mxu0 0
    %2079 = vmatprep.mubr.bf16.mxu0 0
    %2080 = vmatmul.mubr.bf16.gmra.mxu0 %v1975
    %v2081 = vpop.f32.mrf.mxu0
    %v2082 = vadd.f32 %v1997, %v2081
    %v2083 = vpop.f32.mrf.mxu0
    %v2084 = vpop.f32.mrf.mxu0
    %v2085 = vpop.f32.mrf.mxu0
    %2086 = vdwg.mxu0
    %2087 = vst [vmem:[#allocation14] sm:$0xff] %v2082
    // Predicated region
    $region74: #{tpu_custom_call.1} parent=1 // pred_check
      _
    $region75: #{tpu_custom_call.1} parent=1 // pred_check_branch
      %2089 = sbr.rel (0) target = $region77
    $region76: #{tpu_custom_call.1} parent=1 // pred_region
      %s2091 = ssub.s32 128, 128
      %2092 = vsyncadd [#allocation4], %s2091
      %s2094 = sshll.u32 [#allocation14], 4
      %s2095 = int_to_ptr.vmem [resolvable:$true] %s2094
      %2097 = dma.vmem_to_hbm [thread:$0]  %s2095, 128, %s11, [#allocation4]
    $region77: #{tpu_custom_call.1} parent=1 // pred_fallthru
      _
    // Predicated region
    $region78: #{tpu_custom_call.1} parent=1 // pred_check
      _
    $region79: #{tpu_custom_call.1} parent=1 // pred_check_branch
      %2099 = sbr.rel (0) target = $region81
    $region80: #{tpu_custom_call.1} parent=1 // pred_region
      %2100 = dma.done [#allocation4], 128
    $region81: #{tpu_custom_call.1} parent=1 // pred_fallthru
      _
    %2101 = vsyncpa [#allocation3], 1
    %2102 = vsyncpa [#allocation6], 1
    %2103 = vsyncpa [#allocation9], 1
    %2104 = vsyncpa [#allocation12], 1
    %2105 = vsyncpa [#allocation4], 1

</llo_original>
